<compile_context>
chip_gen: v5e
topology: v5e:2x2
jax: 0.10.0
libtpu: 0.0.40
codegen_flags: <defaults>
</compile_context>

<pallas_src>
import functools

import jax
import jax.numpy as jnp
from jax import lax
from jax.experimental import pallas as pl
from jax.experimental.pallas import tpu as pltpu


_VMEM_LIMIT = 32 * 1024 * 1024   # fits v7x (64 MiB physical) and v5e/v6e scoped budgets
_NEG_INF = -1e30                 # finite "-inf" -> no inf-inf NaNs in the online softmax


def _round_up(x, m):
    return ((x + m - 1) // m) * m


def _seq_tile(n):
    """Sequence tile: 128 for real sequence lengths, full (8-aligned) for tiny ones."""
    if n >= 128:
        return 128
    return _round_up(n, 8)


# ----------------------------------------------------------------------------
# Kernel 1: fused qkv projection, VMEM-resident weight, head-major output
# ----------------------------------------------------------------------------
def _qkv_proj_kernel(x_ref, w_ref, o_ref):
    """x_ref: [tm, C], w_ref: [C, 3C] (resident), o_ref: [3, H, tm, D]."""
    # One full-depth GEMM (K = C, N = 3C) -> best MXU utilization.
    acc = jnp.dot(x_ref[...], w_ref[...], preferred_element_type=jnp.float32)
    _, num_heads, _, head_dim = o_ref.shape
    C = num_heads * head_dim
    # Head split via cheap static lane slices (epilogue only; GEMM dominates).
    for c in range(3):                      # static unroll
        for h in range(num_heads):
            off = c * C + h * head_dim
            o_ref[c, h, :, :] = acc[:, off:off + head_dim].astype(o_ref.dtype)


def qkv_projection(x, w_qkv, num_heads, tm):
    """x: [B, Np, C], w_qkv: [C, 3C] (scale already folded into q cols) -> [3,B,H,Np,D]."""
    B, Np, C = x.shape
    H = num_heads
    D = C // H
    grid = (B, Np // tm)
    isz = jnp.dtype(x.dtype).itemsize
    cost = pl.CostEstimate(
        flops=2 * B * Np * C * 3 * C,
        transcendentals=0,
        bytes_accessed=isz * (B * Np * C + 3 * C * C + 3 * B * Np * C))

    return pl.pallas_call(
        _qkv_proj_kernel,
        out_shape=jax.ShapeDtypeStruct((3, B, H, Np, D), x.dtype),
        grid=grid,
        in_specs=[
            pl.BlockSpec((None, tm, C), lambda b, ni: (b, ni, 0)),
            # Constant block index -> full [C, 3C] weight stays VMEM-resident
            # (fetched once) instead of being re-streamed per (batch, row-tile).
            pl.BlockSpec((C, 3 * C), lambda b, ni: (0, 0)),
        ],
        out_specs=pl.BlockSpec((3, None, H, tm, D), lambda b, ni: (0, b, 0, ni, 0)),
        compiler_params=pltpu.CompilerParams(
            dimension_semantics=("parallel", "parallel"),
            vmem_limit_bytes=_VMEM_LIMIT),
        cost_estimate=cost,
    )(x, w_qkv)


# ----------------------------------------------------------------------------
# Kernel 2: flash attention, per-head-chunk grid, token-major output
# ----------------------------------------------------------------------------
def _flash_attn_kernel(q_ref, k_ref, v_ref, o_ref, m_sc, l_sc, acc_sc, *,
                       kv_valid, tkv):
    """q_ref: [hc,tq,D]  k_ref/v_ref: [hc,tkv,D]  o_ref: [tq, hc*D] (token-major)
    m_sc/l_sc: [hc,tq,1] f32   acc_sc: [hc,tq,D] f32.  Scale folded into W_q."""
    ki = pl.program_id(3)

    @pl.when(ki == 0)
    def _init():
        m_sc[...] = jnp.full(m_sc.shape, _NEG_INF, jnp.float32)
        l_sc[...] = jnp.zeros(l_sc.shape, jnp.float32)
        acc_sc[...] = jnp.zeros(acc_sc.shape, jnp.float32)

    # [hc, tq, tkv] f32 scores; leading-batch einsum -> no transposes.
    s = jnp.einsum("hqd,hkd->hqk", q_ref[...], k_ref[...],
                   preferred_element_type=jnp.float32)

    if kv_valid is not None:   # static: only emitted when the sequence was padded
        col = ki * tkv + lax.broadcasted_iota(jnp.int32, s.shape, 2)
        s = jnp.where(col < kv_valid, s, _NEG_INF)

    m_prev = m_sc[...]
    m_new = jnp.maximum(m_prev, jnp.max(s, axis=-1, keepdims=True))
    alpha = jnp.exp(m_prev - m_new)
    p = jnp.exp(s - m_new)

    l_sc[...] = alpha * l_sc[...] + jnp.sum(p, axis=-1, keepdims=True)
    pv = jnp.einsum("hqk,hkd->hqd", p.astype(v_ref.dtype), v_ref[...],
                    preferred_element_type=jnp.float32)
    acc_sc[...] = alpha * acc_sc[...] + pv
    m_sc[...] = m_new

    @pl.when(ki == pl.num_programs(3) - 1)
    def _finalize():
        out = acc_sc[...] / l_sc[...]          # exact normalization (no approx recip)
        hc, _, d = acc_sc.shape
        for h in range(hc):                    # epilogue only; o block is lane-dense
            o_ref[:, h * d:(h + 1) * d] = out[h].astype(o_ref.dtype)


def flash_attention(qkv, n_valid, tq):
    """qkv: [3,B,H,Np,D] -> attn_out: [B,Np,C] token-major."""
    _, B, H, Np, D = qkv.shape
    C = H * D
    hc = min(H, max(1, 128 // D))   # head chunk: keep block lane width ~128
    while H % hc:
        hc -= 1
    tkv = tq
    grid = (B, H // hc, Np // tq, Np // tkv)
    kv_valid = n_valid if n_valid != Np else None

    q_spec = pl.BlockSpec((None, None, hc, tq, D), lambda b, g, qi, ki: (0, b, g, qi, 0))
    k_spec = pl.BlockSpec((None, None, hc, tkv, D), lambda b, g, qi, ki: (1, b, g, ki, 0))
    v_spec = pl.BlockSpec((None, None, hc, tkv, D), lambda b, g, qi, ki: (2, b, g, ki, 0))
    o_spec = pl.BlockSpec((None, tq, hc * D), lambda b, g, qi, ki: (b, qi, g))

    isz = jnp.dtype(qkv.dtype).itemsize
    cost = pl.CostEstimate(
        flops=4 * B * H * Np * Np * D,
        transcendentals=B * H * Np * Np,
        bytes_accessed=isz * (3 * B * H * Np * D + B * Np * C))

    kernel = functools.partial(_flash_attn_kernel, kv_valid=kv_valid, tkv=tkv)
    return pl.pallas_call(
        kernel,
        out_shape=jax.ShapeDtypeStruct((B, Np, C), qkv.dtype),
        grid=grid,
        in_specs=[q_spec, k_spec, v_spec],
        out_specs=o_spec,
        scratch_shapes=[
            pltpu.VMEM((hc, tq, 1), jnp.float32),   # running max
            pltpu.VMEM((hc, tq, 1), jnp.float32),   # running denominator
            pltpu.VMEM((hc, tq, D), jnp.float32),   # running output accumulator
        ],
        compiler_params=pltpu.CompilerParams(
            dimension_semantics=("parallel", "parallel", "parallel", "arbitrary"),
            vmem_limit_bytes=_VMEM_LIMIT),
        cost_estimate=cost,
    )(qkv, qkv, qkv)


# ----------------------------------------------------------------------------
# Kernel 3: output projection — single full-depth GEMM, resident weight + bias
# ----------------------------------------------------------------------------
def _out_proj_kernel(x_ref, w_ref, b_ref, o_ref):
    """x_ref: [tm, C] (token-major), w_ref: [C, C], b_ref: [1, C] f32, o_ref: [tm, C]."""
    acc = jnp.dot(x_ref[...], w_ref[...], preferred_element_type=jnp.float32)
    o_ref[...] = (acc + b_ref[...]).astype(o_ref.dtype)


def out_projection(attn_out, w_proj, b_proj, out_dtype, tm):
    """attn_out: [B,Np,C], w_proj: [C,C], b_proj: [1,C] f32 -> [B,Np,C] (out_dtype)."""
    B, Np, C = attn_out.shape
    grid = (B, Np // tm)
    isz = jnp.dtype(attn_out.dtype).itemsize
    cost = pl.CostEstimate(
        flops=2 * B * Np * C * C,
        transcendentals=0,
        bytes_accessed=isz * (B * Np * C + C * C)
        + jnp.dtype(out_dtype).itemsize * B * Np * C + 4 * C)

    return pl.pallas_call(
        _out_proj_kernel,
        out_shape=jax.ShapeDtypeStruct((B, Np, C), out_dtype),
        grid=grid,
        in_specs=[
            pl.BlockSpec((None, tm, C), lambda b, ni: (b, ni, 0)),
            pl.BlockSpec((C, C), lambda b, ni: (0, 0)),   # resident weight
            pl.BlockSpec((1, C), lambda b, ni: (0, 0)),   # resident bias (f32)
        ],
        out_specs=pl.BlockSpec((None, tm, C), lambda b, ni: (b, ni, 0)),
        compiler_params=pltpu.CompilerParams(
            dimension_semantics=("parallel", "parallel"),
            vmem_limit_bytes=_VMEM_LIMIT),
        cost_estimate=cost,
    )(attn_out, w_proj, b_proj)


# ----------------------------------------------------------------------------
# Full forward pass
# ----------------------------------------------------------------------------
def attention_forward(x, params, num_heads, *, compute_dtype=jnp.bfloat16):
    B, N, C = x.shape
    H = num_heads
    assert C % H == 0, "dim must be divisible by num_heads"
    D = C // H
    scale = D ** (-0.5)
    out_dtype = x.dtype
    cdt = jnp.dtype(compute_dtype) if compute_dtype is not None else x.dtype

    # Weight prep (tiny [C,3C]/[C,C] tensors, trace-time only).
    # Params are stored [in, out] so kernels compute x @ W directly.
    # Fold the softmax scale into the q columns -> no per-kv-step q scaling in-kernel.
    col_scale = jnp.concatenate([jnp.full((C,), scale, params["w_qkv"].dtype),
                                 jnp.ones((2 * C,), params["w_qkv"].dtype)])
    w_qkv = (params["w_qkv"] * col_scale[None, :]).astype(cdt)     # [C, 3C]
    w_proj = params["w_proj"].astype(cdt)                          # [C, C]
    b_proj = params["b_proj"].reshape(1, C).astype(jnp.float32)

    # Pad the sequence to the tile (128 for real sequences); padded kv positions
    # are masked inside the attention kernel, padded rows are sliced off at the end.
    tile = _seq_tile(N)
    Np = _round_up(N, tile)
    x_p = x.astype(cdt)
    if Np != N:
        x_p = jnp.pad(x_p, ((0, 0), (0, Np - N), (0, 0)))

    # TODO(synk): qk_norm / attn_drop / proj_drop branches omitted
    # (qk_norm=False and drop=0.0 are identities in the reference module).
    qkv = qkv_projection(x_p, w_qkv, H, tile)            # [3, B, H, Np, D]
    attn = flash_attention(qkv, N, tile)                 # [B, Np, C] token-major
    out = out_projection(attn, w_proj, b_proj, out_dtype, tile)    # [B, Np, C]
    if Np != N:
        out = out[:, :N, :]
    return out


def init_params(key, dim):
    # Weights stored as [in_features, out_features] (transpose of the PyTorch layout).
    # qkv_bias=False -> no qkv bias.
    k1, k2, k3 = jax.random.split(key, 3)
    return {
        "w_qkv": jax.random.normal(k1, (dim, 3 * dim), jnp.float32) * 0.02,
        "w_proj": jax.random.normal(k2, (dim, dim), jnp.float32) * 0.02,
        "b_proj": jax.random.normal(k3, (dim,), jnp.float32) * 0.02,
    }


if __name__ == "__main__":
    B, N, C = 2, 12, 64          # N=12 exercises the padding + kv-mask path (pads to 16)
    num_heads = 4
    head_dim = C // num_heads

    key = jax.random.PRNGKey(0)
    kx, kp = jax.random.split(key)
    x = jax.random.normal(kx, (B, N, C), jnp.float32)
    params = init_params(kp, C)

    # Pure-JAX f32 reference (mirrors the PyTorch module with default flags).
    scale = head_dim ** (-0.5)
    qkv_r = (x.reshape(B * N, C) @ params["w_qkv"]).reshape(B, N, 3, num_heads, head_dim)
    qkv_r = jnp.transpose(qkv_r, (2, 0, 3, 1, 4))
    q_r, k_r, v_r = qkv_r[0] * scale, qkv_r[1], qkv_r[2]
    attn_r = jax.nn.softmax(jnp.einsum("bhqd,bhkd->bhqk", q_r, k_r), axis=-1)
    ref = jnp.einsum("bhqk,bhkd->bhqd", attn_r, v_r)
    ref = jnp.transpose(ref, (0, 2, 1, 3)).reshape(B, N, C)
    ref = ref @ params["w_proj"] + params["b_proj"]

    # Default (performance) path: bf16 operands, f32 accumulation.
    fwd_bf16 = jax.jit(functools.partial(attention_forward, num_heads=num_heads))
    out_bf16 = jax.block_until_ready(fwd_bf16(x, params))

    # f32 compute path: verifies exact algorithmic parity (no approx reciprocal).
    fwd_f32 = jax.jit(functools.partial(attention_forward, num_heads=num_heads,
                                        compute_dtype=jnp.float32))
    out_f32 = jax.block_until_ready(fwd_f32(x, params))

    assert out_bf16.shape == (B, N, C) and out_f32.shape == (B, N, C)
    assert jnp.allclose(out_f32, ref, atol=1e-3, rtol=1e-3), "f32 mismatch vs reference"
    # bf16 path: error bounded by bf16 operand rounding only (f32 accumulation,
    # exact softmax normalization).
    assert jnp.allclose(out_bf16, ref, atol=1e-2, rtol=2e-2), "bf16 mismatch vs reference"
    print("KERNEL_OK")
</pallas_src>

<mosaic_0001>
module attributes {stable_mosaic.version = 11 : i64} {
  func.func @_out_proj_kernel(%arg0: i32, %arg1: i32, %arg2: memref<1x16x64xbf16, #tpu.memory_space<vmem>>, %arg3: memref<64x64xbf16, #tpu.memory_space<vmem>>, %arg4: memref<1x64xf32, #tpu.memory_space<vmem>>, %arg5: memref<1x16x64xf32, #tpu.memory_space<vmem>>) attributes {dimension_semantics = [#tpu.dimension_semantics<parallel>, #tpu.dimension_semantics<parallel>], iteration_bounds = array<i64: 2, 1>, scalar_prefetch = 0 : i64, scratch_operands = 0 : i64, tpu.core_type = #tpu.core_type<tc>, window_params = [{transform_indices = @transform_0, window_bounds = array<i64: 1, 16, 64>}, {pipeline_mode = #tpu.pipeline_mode<synchronous>, transform_indices = @transform_1, window_bounds = array<i64: 64, 64>}, {pipeline_mode = #tpu.pipeline_mode<synchronous>, transform_indices = @transform_2, window_bounds = array<i64: 1, 64>}, {transform_indices = @transform_3, window_bounds = array<i64: 1, 16, 64>}]} {
    %c0 = arith.constant 0 : index
    %c0_0 = arith.constant 0 : index
    %c0_1 = arith.constant 0 : index
    %0 = vector.load %arg2[%c0, %c0_0, %c0_1] : memref<1x16x64xbf16, #tpu.memory_space<vmem>>, vector<1x16x64xbf16>
    %1 = vector.shape_cast %0 : vector<1x16x64xbf16> to vector<16x64xbf16>
    %c0_2 = arith.constant 0 : index
    %c0_3 = arith.constant 0 : index
    %2 = vector.load %arg3[%c0_2, %c0_3] : memref<64x64xbf16, #tpu.memory_space<vmem>>, vector<64x64xbf16>
    %cst = arith.constant dense<0.000000e+00> : vector<16x64xf32>
    %3 = tpu.matmul %1, %2, %cst {dimension_numbers = #tpu.dot_dimension_numbers<[1], [0], [0], [1], [0, 0, 1, 1], [], []>} : vector<16x64xbf16>, vector<64x64xbf16>, vector<16x64xf32> -> vector<16x64xf32>
    %c0_4 = arith.constant 0 : index
    %c0_5 = arith.constant 0 : index
    %4 = vector.load %arg4[%c0_4, %c0_5] : memref<1x64xf32, #tpu.memory_space<vmem>>, vector<1x64xf32>
    %5 = vector.broadcast %4 : vector<1x64xf32> to vector<16x64xf32>
    %6 = arith.addf %3, %5 : vector<16x64xf32>
    %c0_6 = arith.constant 0 : index
    %c0_7 = arith.constant 0 : index
    %c0_8 = arith.constant 0 : index
    %7 = vector.load %arg5[%c0_6, %c0_7, %c0_8] : memref<1x16x64xf32, #tpu.memory_space<vmem>>, vector<1x16x64xf32>
    %8 = vector.shape_cast %7 : vector<1x16x64xf32> to vector<16x64xf32>
    %9 = vector.shape_cast %6 : vector<16x64xf32> to vector<1x16x64xf32>
    tpu.vector_store %arg5[%c0_6, %c0_7, %c0_8], %9 {strides = array<i32>} : memref<1x16x64xf32, #tpu.memory_space<vmem>>, vector<1x16x64xf32>,
    return
  }
  func.func @transform_0(%arg0: i32, %arg1: i32) -> (i32, i32, i32) {
    %c0_i32 = arith.constant 0 : i32
    %c0_i32_0 = arith.constant 0 : i32
    return %arg0, %arg1, %c0_i32 : i32, i32, i32
  }
  func.func @transform_1(%arg0: i32, %arg1: i32) -> (i32, i32) {
    %c0_i32 = arith.constant 0 : i32
    %c0_i32_0 = arith.constant 0 : i32
    %c0_i32_1 = arith.constant 0 : i32
    return %c0_i32, %c0_i32_0 : i32, i32
  }
  func.func @transform_2(%arg0: i32, %arg1: i32) -> (i32, i32) {
    %c0_i32 = arith.constant 0 : i32
    %c0_i32_0 = arith.constant 0 : i32
    %c0_i32_1 = arith.constant 0 : i32
    return %c0_i32, %c0_i32_0 : i32, i32
  }
  func.func @transform_3(%arg0: i32, %arg1: i32) -> (i32, i32, i32) {
    %c0_i32 = arith.constant 0 : i32
    %c0_i32_0 = arith.constant 0 : i32
    return %arg0, %arg1, %c0_i32 : i32, i32, i32
  }
}

module attributes {stable_mosaic.version = 11 : i64} {
  func.func @_flash_attn_kernel(%arg0: i32, %arg1: i32, %arg2: i32, %arg3: i32, %arg4: memref<1x1x4x16x16xbf16, #tpu.memory_space<vmem>>, %arg5: memref<1x1x4x16x16xbf16, #tpu.memory_space<vmem>>, %arg6: memref<1x1x4x16x16xbf16, #tpu.memory_space<vmem>>, %arg7: memref<1x16x64xbf16, #tpu.memory_space<vmem>>, %arg8: memref<4x16x1xf32, #tpu.memory_space<vmem>>, %arg9: memref<4x16x1xf32, #tpu.memory_space<vmem>>, %arg10: memref<4x16x16xf32, #tpu.memory_space<vmem>>) attributes {dimension_semantics = [#tpu.dimension_semantics<parallel>, #tpu.dimension_semantics<parallel>, #tpu.dimension_semantics<parallel>, #tpu.dimension_semantics<arbitrary>], iteration_bounds = array<i64: 2, 1, 1, 1>, scalar_prefetch = 0 : i64, scratch_operands = 3 : i64, tpu.core_type = #tpu.core_type<tc>, window_params = [{transform_indices = @transform_0, window_bounds = array<i64: 1, 1, 4, 16, 16>}, {transform_indices = @transform_1, window_bounds = array<i64: 1, 1, 4, 16, 16>}, {transform_indices = @transform_2, window_bounds = array<i64: 1, 1, 4, 16, 16>}, {transform_indices = @transform_3, window_bounds = array<i64: 1, 16, 64>}]} {
    %c0_i32 = arith.constant 0 : i32
    %0 = arith.cmpi eq, %arg3, %c0_i32 : i32
    %1 = arith.extui %0 : i1 to i32
    %c0_i32_0 = arith.constant 0 : i32
    %2 = arith.cmpi ne, %1, %c0_i32_0 : i32
    scf.if %2 {
      %cst_39 = arith.constant -1.000000e+30 : f32
      %44 = vector.broadcast %cst_39 : f32 to vector<4x16x1xf32>
      %c0_40 = arith.constant 0 : index
      %c0_41 = arith.constant 0 : index
      %c0_42 = arith.constant 0 : index
      %45 = vector.load %arg8[%c0_40, %c0_41, %c0_42] : memref<4x16x1xf32, #tpu.memory_space<vmem>>, vector<4x16x1xf32>
      tpu.vector_store %arg8[%c0_40, %c0_41, %c0_42], %44 {strides = array<i32>} : memref<4x16x1xf32, #tpu.memory_space<vmem>>, vector<4x16x1xf32>,
      %cst_43 = arith.constant 0.000000e+00 : f32
      %46 = vector.broadcast %cst_43 : f32 to vector<4x16x1xf32>
      %c0_44 = arith.constant 0 : index
      %c0_45 = arith.constant 0 : index
      %c0_46 = arith.constant 0 : index
      %47 = vector.load %arg9[%c0_44, %c0_45, %c0_46] : memref<4x16x1xf32, #tpu.memory_space<vmem>>, vector<4x16x1xf32>
      tpu.vector_store %arg9[%c0_44, %c0_45, %c0_46], %46 {strides = array<i32>} : memref<4x16x1xf32, #tpu.memory_space<vmem>>, vector<4x16x1xf32>,
      %cst_47 = arith.constant 0.000000e+00 : f32
      %48 = vector.broadcast %cst_47 : f32 to vector<4x16x16xf32>
      %c0_48 = arith.constant 0 : index
      %c0_49 = arith.constant 0 : index
      %c0_50 = arith.constant 0 : index
      %49 = vector.load %arg10[%c0_48, %c0_49, %c0_50] : memref<4x16x16xf32, #tpu.memory_space<vmem>>, vector<4x16x16xf32>
      tpu.vector_store %arg10[%c0_48, %c0_49, %c0_50], %48 {strides = array<i32>} : memref<4x16x16xf32, #tpu.memory_space<vmem>>, vector<4x16x16xf32>,
    } else {
    }
    %c0 = arith.constant 0 : index
    %c0_1 = arith.constant 0 : index
    %c0_2 = arith.constant 0 : index
    %c0_3 = arith.constant 0 : index
    %c0_4 = arith.constant 0 : index
    %3 = vector.load %arg4[%c0, %c0_1, %c0_2, %c0_3, %c0_4] : memref<1x1x4x16x16xbf16, #tpu.memory_space<vmem>>, vector<1x1x4x16x16xbf16>
    %4 = vector.shape_cast %3 : vector<1x1x4x16x16xbf16> to vector<4x16x16xbf16>
    %c0_5 = arith.constant 0 : index
    %c0_6 = arith.constant 0 : index
    %c0_7 = arith.constant 0 : index
    %c0_8 = arith.constant 0 : index
    %c0_9 = arith.constant 0 : index
    %5 = vector.load %arg5[%c0_5, %c0_6, %c0_7, %c0_8, %c0_9] : memref<1x1x4x16x16xbf16, #tpu.memory_space<vmem>>, vector<1x1x4x16x16xbf16>
    %6 = vector.shape_cast %5 : vector<1x1x4x16x16xbf16> to vector<4x16x16xbf16>
    "tpu.trace_start"() <{level = 10 : i32, message = "hqd,hkd->hqk"}> : () -> ()
    %cst = arith.constant dense<0.000000e+00> : vector<4x16x16xf32>
    %7 = tpu.matmul %4, %6, %cst {dimension_numbers = #tpu.dot_dimension_numbers<[2], [2], [1], [1], [0, 0, 0, 1, 1, 1], [0], [0]>} : vector<4x16x16xbf16>, vector<4x16x16xbf16>, vector<4x16x16xf32> -> vector<4x16x16xf32>
    "tpu.trace_stop"() : () -> ()
    %c16_i32 = arith.constant 16 : i32
    %8 = arith.muli %arg3, %c16_i32 : i32
    %9 = tpu.iota {dimensions = array<i32: 2>} : vector<4x16x16xi32>
    %10 = vector.broadcast %8 : i32 to vector<4x16x16xi32>
    %11 = arith.addi %10, %9 : vector<4x16x16xi32>
    %c12_i32 = arith.constant 12 : i32
    %12 = vector.broadcast %c12_i32 : i32 to vector<4x16x16xi32>
    %13 = arith.cmpi slt, %11, %12 : vector<4x16x16xi32>
    %cst_10 = arith.constant -1.000000e+30 : f32
    %14 = vector.broadcast %cst_10 : f32 to vector<4x16x16xf32>
    %15 = arith.select %13, %7, %14 : vector<4x16x16xi1>, vector<4x16x16xf32>
    %c0_11 = arith.constant 0 : index
    %c0_12 = arith.constant 0 : index
    %c0_13 = arith.constant 0 : index
    %16 = vector.load %arg8[%c0_11, %c0_12, %c0_13] : memref<4x16x1xf32, #tpu.memory_space<vmem>>, vector<4x16x1xf32>
    %cst_14 = arith.constant dense<0xFF800000> : vector<4x16xf32>
    %17 = vector.multi_reduction <maximumf>, %15, %cst_14 [2] : vector<4x16x16xf32> to vector<4x16xf32>
    %18 = vector.shape_cast %17 : vector<4x16xf32> to vector<4x16x1xf32>
    %19 = arith.maximumf %16, %18 : vector<4x16x1xf32>
    %20 = arith.subf %16, %19 : vector<4x16x1xf32>
    %21 = math.exp %20 : vector<4x16x1xf32>
    %22 = vector.broadcast %19 : vector<4x16x1xf32> to vector<4x16x16xf32>
    %23 = arith.subf %15, %22 : vector<4x16x16xf32>
    %24 = math.exp %23 : vector<4x16x16xf32>
    %c0_15 = arith.constant 0 : index
    %c0_16 = arith.constant 0 : index
    %c0_17 = arith.constant 0 : index
    %25 = vector.load %arg9[%c0_15, %c0_16, %c0_17] : memref<4x16x1xf32, #tpu.memory_space<vmem>>, vector<4x16x1xf32>
    %26 = arith.mulf %21, %25 : vector<4x16x1xf32>
    %cst_18 = arith.constant dense<0.000000e+00> : vector<4x16xf32>
    %27 = vector.multi_reduction <add>, %24, %cst_18 [2] : vector<4x16x16xf32> to vector<4x16xf32>
    %28 = vector.shape_cast %27 : vector<4x16xf32> to vector<4x16x1xf32>
    %29 = arith.addf %26, %28 : vector<4x16x1xf32>
    %c0_19 = arith.constant 0 : index
    %c0_20 = arith.constant 0 : index
    %c0_21 = arith.constant 0 : index
    %30 = vector.load %arg9[%c0_19, %c0_20, %c0_21] : memref<4x16x1xf32, #tpu.memory_space<vmem>>, vector<4x16x1xf32>
    tpu.vector_store %arg9[%c0_19, %c0_20, %c0_21], %29 {strides = array<i32>} : memref<4x16x1xf32, #tpu.memory_space<vmem>>, vector<4x16x1xf32>,
    %31 = arith.truncf %24 : vector<4x16x16xf32> to vector<4x16x16xbf16>
    %c0_22 = arith.constant 0 : index
    %c0_23 = arith.constant 0 : index
    %c0_24 = arith.constant 0 : index
    %c0_25 = arith.constant 0 : index
    %c0_26 = arith.constant 0 : index
    %32 = vector.load %arg6[%c0_22, %c0_23, %c0_24, %c0_25, %c0_26] : memref<1x1x4x16x16xbf16, #tpu.memory_space<vmem>>, vector<1x1x4x16x16xbf16>
    %33 = vector.shape_cast %32 : vector<1x1x4x16x16xbf16> to vector<4x16x16xbf16>
    "tpu.trace_start"() <{level = 10 : i32, message = "hqk,hkd->hqd"}> : () -> ()
    %cst_27 = arith.constant dense<0.000000e+00> : vector<4x16x16xf32>
    %34 = tpu.matmul %31, %33, %cst_27 {dimension_numbers = #tpu.dot_dimension_numbers<[2], [1], [1], [2], [0, 0, 0, 1, 1, 2], [0], [0]>} : vector<4x16x16xbf16>, vector<4x16x16xbf16>, vector<4x16x16xf32> -> vector<4x16x16xf32>
    "tpu.trace_stop"() : () -> ()
    %c0_28 = arith.constant 0 : index
    %c0_29 = arith.constant 0 : index
    %c0_30 = arith.constant 0 : index
    %35 = vector.load %arg10[%c0_28, %c0_29, %c0_30] : memref<4x16x16xf32, #tpu.memory_space<vmem>>, vector<4x16x16xf32>
    %36 = vector.broadcast %21 : vector<4x16x1xf32> to vector<4x16x16xf32>
    %37 = arith.mulf %36, %35 : vector<4x16x16xf32>
    %38 = arith.addf %37, %34 : vector<4x16x16xf32>
    %c0_31 = arith.constant 0 : index
    %c0_32 = arith.constant 0 : index
    %c0_33 = arith.constant 0 : index
    %39 = vector.load %arg10[%c0_31, %c0_32, %c0_33] : memref<4x16x16xf32, #tpu.memory_space<vmem>>, vector<4x16x16xf32>
    tpu.vector_store %arg10[%c0_31, %c0_32, %c0_33], %38 {strides = array<i32>} : memref<4x16x16xf32, #tpu.memory_space<vmem>>, vector<4x16x16xf32>,
    %c0_34 = arith.constant 0 : index
    %c0_35 = arith.constant 0 : index
    %c0_36 = arith.constant 0 : index
    %40 = vector.load %arg8[%c0_34, %c0_35, %c0_36] : memref<4x16x1xf32, #tpu.memory_space<vmem>>, vector<4x16x1xf32>
    tpu.vector_store %arg8[%c0_34, %c0_35, %c0_36], %19 {strides = array<i32>} : memref<4x16x1xf32, #tpu.memory_space<vmem>>, vector<4x16x1xf32>,
    %c0_i32_37 = arith.constant 0 : i32
    %41 = arith.cmpi eq, %arg3, %c0_i32_37 : i32
    %42 = arith.extui %41 : i1 to i32
    %c0_i32_38 = arith.constant 0 : i32
    %43 = arith.cmpi ne, %42, %c0_i32_38 : i32
    scf.if %43 {
      %c0_39 = arith.constant 0 : index
      %c0_40 = arith.constant 0 : index
      %c0_41 = arith.constant 0 : index
      %44 = vector.load %arg10[%c0_39, %c0_40, %c0_41] : memref<4x16x16xf32, #tpu.memory_space<vmem>>, vector<4x16x16xf32>
      %c0_42 = arith.constant 0 : index
      %c0_43 = arith.constant 0 : index
      %c0_44 = arith.constant 0 : index
      %45 = vector.load %arg9[%c0_42, %c0_43, %c0_44] : memref<4x16x1xf32, #tpu.memory_space<vmem>>, vector<4x16x1xf32>
      %46 = vector.broadcast %45 : vector<4x16x1xf32> to vector<4x16x16xf32>
      %47 = arith.divf %44, %46 : vector<4x16x16xf32>
      %48 = vector.extract_strided_slice %47 {offsets = [0, 0, 0], sizes = [1, 16, 16], strides = [1, 1, 1]} : vector<4x16x16xf32> to vector<1x16x16xf32>
      %49 = vector.shape_cast %48 : vector<1x16x16xf32> to vector<16x16xf32>
      %50 = arith.truncf %49 : vector<16x16xf32> to vector<16x16xbf16>
      %c0_45 = arith.constant 0 : index
      %c0_46 = arith.constant 0 : index
      %c0_47 = arith.constant 0 : index
      %51 = vector.load %arg7[%c0_45, %c0_46, %c0_47] : memref<1x16x64xbf16, #tpu.memory_space<vmem>>, vector<1x16x16xbf16>
      %52 = vector.shape_cast %51 : vector<1x16x16xbf16> to vector<16x16xbf16>
      %53 = vector.shape_cast %50 : vector<16x16xbf16> to vector<1x16x16xbf16>
      tpu.vector_store %arg7[%c0_45, %c0_46, %c0_47], %53 {strides = array<i32>} : memref<1x16x64xbf16, #tpu.memory_space<vmem>>, vector<1x16x16xbf16>,
      %54 = vector.extract_strided_slice %47 {offsets = [1, 0, 0], sizes = [1, 16, 16], strides = [1, 1, 1]} : vector<4x16x16xf32> to vector<1x16x16xf32>
      %55 = vector.shape_cast %54 : vector<1x16x16xf32> to vector<16x16xf32>
      %56 = arith.truncf %55 : vector<16x16xf32> to vector<16x16xbf16>
      %c0_48 = arith.constant 0 : index
      %c0_49 = arith.constant 0 : index
      %c16 = arith.constant 16 : index
      %57 = vector.load %arg7[%c0_48, %c0_49, %c16] : memref<1x16x64xbf16, #tpu.memory_space<vmem>>, vector<1x16x16xbf16>
      %58 = vector.shape_cast %57 : vector<1x16x16xbf16> to vector<16x16xbf16>
      %59 = vector.shape_cast %56 : vector<16x16xbf16> to vector<1x16x16xbf16>
      tpu.vector_store %arg7[%c0_48, %c0_49, %c16], %59 {strides = array<i32>} : memref<1x16x64xbf16, #tpu.memory_space<vmem>>, vector<1x16x16xbf16>,
      %60 = vector.extract_strided_slice %47 {offsets = [2, 0, 0], sizes = [1, 16, 16], strides = [1, 1, 1]} : vector<4x16x16xf32> to vector<1x16x16xf32>
      %61 = vector.shape_cast %60 : vector<1x16x16xf32> to vector<16x16xf32>
      %62 = arith.truncf %61 : vector<16x16xf32> to vector<16x16xbf16>
      %c0_50 = arith.constant 0 : index
      %c0_51 = arith.constant 0 : index
      %c32 = arith.constant 32 : index
      %63 = vector.load %arg7[%c0_50, %c0_51, %c32] : memref<1x16x64xbf16, #tpu.memory_space<vmem>>, vector<1x16x16xbf16>
      %64 = vector.shape_cast %63 : vector<1x16x16xbf16> to vector<16x16xbf16>
      %65 = vector.shape_cast %62 : vector<16x16xbf16> to vector<1x16x16xbf16>
      tpu.vector_store %arg7[%c0_50, %c0_51, %c32], %65 {strides = array<i32>} : memref<1x16x64xbf16, #tpu.memory_space<vmem>>, vector<1x16x16xbf16>,
      %66 = vector.extract_strided_slice %47 {offsets = [3, 0, 0], sizes = [1, 16, 16], strides = [1, 1, 1]} : vector<4x16x16xf32> to vector<1x16x16xf32>
      %67 = vector.shape_cast %66 : vector<1x16x16xf32> to vector<16x16xf32>
      %68 = arith.truncf %67 : vector<16x16xf32> to vector<16x16xbf16>
      %c0_52 = arith.constant 0 : index
      %c0_53 = arith.constant 0 : index
      %c48 = arith.constant 48 : index
      %69 = vector.load %arg7[%c0_52, %c0_53, %c48] : memref<1x16x64xbf16, #tpu.memory_space<vmem>>, vector<1x16x16xbf16>
      %70 = vector.shape_cast %69 : vector<1x16x16xbf16> to vector<16x16xbf16>
      %71 = vector.shape_cast %68 : vector<16x16xbf16> to vector<1x16x16xbf16>
      tpu.vector_store %arg7[%c0_52, %c0_53, %c48], %71 {strides = array<i32>} : memref<1x16x64xbf16, #tpu.memory_space<vmem>>, vector<1x16x16xbf16>,
    } else {
    }
    return
  }
  func.func @transform_0(%arg0: i32, %arg1: i32, %arg2: i32, %arg3: i32) -> (i32, i32, i32, i32, i32) {
    %c0_i32 = arith.constant 0 : i32
    %c0_i32_0 = arith.constant 0 : i32
    %c0_i32_1 = arith.constant 0 : i32
    return %c0_i32, %arg0, %arg1, %arg2, %c0_i32_0 : i32, i32, i32, i32, i32
  }
  func.func @transform_1(%arg0: i32, %arg1: i32, %arg2: i32, %arg3: i32) -> (i32, i32, i32, i32, i32) {
    %c1_i32 = arith.constant 1 : i32
    %c0_i32 = arith.constant 0 : i32
    %c0_i32_0 = arith.constant 0 : i32
    return %c1_i32, %arg0, %arg1, %arg3, %c0_i32 : i32, i32, i32, i32, i32
  }
  func.func @transform_2(%arg0: i32, %arg1: i32, %arg2: i32, %arg3: i32) -> (i32, i32, i32, i32, i32) {
    %c2_i32 = arith.constant 2 : i32
    %c0_i32 = arith.constant 0 : i32
    %c0_i32_0 = arith.constant 0 : i32
    return %c2_i32, %arg0, %arg1, %arg3, %c0_i32 : i32, i32, i32, i32, i32
  }
  func.func @transform_3(%arg0: i32, %arg1: i32, %arg2: i32, %arg3: i32) -> (i32, i32, i32) {
    %c0_i32 = arith.constant 0 : i32
    return %arg0, %arg2, %arg1 : i32, i32, i32
  }
}

module attributes {stable_mosaic.version = 11 : i64} {
  func.func @_qkv_proj_kernel(%arg0: i32, %arg1: i32, %arg2: memref<1x16x64xbf16, #tpu.memory_space<vmem>>, %arg3: memref<64x192xbf16, #tpu.memory_space<vmem>>, %arg4: memref<3x1x4x16x16xbf16, #tpu.memory_space<vmem>>) attributes {dimension_semantics = [#tpu.dimension_semantics<parallel>, #tpu.dimension_semantics<parallel>], iteration_bounds = array<i64: 2, 1>, scalar_prefetch = 0 : i64, scratch_operands = 0 : i64, tpu.core_type = #tpu.core_type<tc>, window_params = [{transform_indices = @transform_0, window_bounds = array<i64: 1, 16, 64>}, {pipeline_mode = #tpu.pipeline_mode<synchronous>, transform_indices = @transform_1, window_bounds = array<i64: 64, 192>}, {transform_indices = @transform_2, window_bounds = array<i64: 3, 1, 4, 16, 16>}]} {
    %c0 = arith.constant 0 : index
    %c0_0 = arith.constant 0 : index
    %c0_1 = arith.constant 0 : index
    %0 = vector.load %arg2[%c0, %c0_0, %c0_1] : memref<1x16x64xbf16, #tpu.memory_space<vmem>>, vector<1x16x64xbf16>
    %1 = vector.shape_cast %0 : vector<1x16x64xbf16> to vector<16x64xbf16>
    %c0_2 = arith.constant 0 : index
    %c0_3 = arith.constant 0 : index
    %2 = vector.load %arg3[%c0_2, %c0_3] : memref<64x192xbf16, #tpu.memory_space<vmem>>, vector<64x192xbf16>
    %cst = arith.constant dense<0.000000e+00> : vector<16x192xf32>
    %3 = tpu.matmul %1, %2, %cst {dimension_numbers = #tpu.dot_dimension_numbers<[1], [0], [0], [1], [0, 0, 1, 1], [], []>} : vector<16x64xbf16>, vector<64x192xbf16>, vector<16x192xf32> -> vector<16x192xf32>
    %4 = vector.extract_strided_slice %3 {offsets = [0, 0], sizes = [16, 16], strides = [1, 1]} : vector<16x192xf32> to vector<16x16xf32>
    %5 = arith.truncf %4 : vector<16x16xf32> to vector<16x16xbf16>
    %c0_4 = arith.constant 0 : index
    %c0_5 = arith.constant 0 : index
    %c0_6 = arith.constant 0 : index
    %c0_7 = arith.constant 0 : index
    %c0_8 = arith.constant 0 : index
    %6 = vector.load %arg4[%c0_4, %c0_5, %c0_6, %c0_7, %c0_8] : memref<3x1x4x16x16xbf16, #tpu.memory_space<vmem>>, vector<1x1x1x16x16xbf16>
    %7 = vector.shape_cast %6 : vector<1x1x1x16x16xbf16> to vector<16x16xbf16>
    %8 = vector.shape_cast %5 : vector<16x16xbf16> to vector<1x1x1x16x16xbf16>
    tpu.vector_store %arg4[%c0_4, %c0_5, %c0_6, %c0_7, %c0_8], %8 {strides = array<i32>} : memref<3x1x4x16x16xbf16, #tpu.memory_space<vmem>>, vector<1x1x1x16x16xbf16>,
    %9 = vector.extract_strided_slice %3 {offsets = [0, 16], sizes = [16, 16], strides = [1, 1]} : vector<16x192xf32> to vector<16x16xf32>
    %10 = arith.truncf %9 : vector<16x16xf32> to vector<16x16xbf16>
    %c0_9 = arith.constant 0 : index
    %c0_10 = arith.constant 0 : index
    %c1 = arith.constant 1 : index
    %c0_11 = arith.constant 0 : index
    %c0_12 = arith.constant 0 : index
    %11 = vector.load %arg4[%c0_9, %c0_10, %c1, %c0_11, %c0_12] : memref<3x1x4x16x16xbf16, #tpu.memory_space<vmem>>, vector<1x1x1x16x16xbf16>
    %12 = vector.shape_cast %11 : vector<1x1x1x16x16xbf16> to vector<16x16xbf16>
    %13 = vector.shape_cast %10 : vector<16x16xbf16> to vector<1x1x1x16x16xbf16>
    tpu.vector_store %arg4[%c0_9, %c0_10, %c1, %c0_11, %c0_12], %13 {strides = array<i32>} : memref<3x1x4x16x16xbf16, #tpu.memory_space<vmem>>, vector<1x1x1x16x16xbf16>,
    %14 = vector.extract_strided_slice %3 {offsets = [0, 32], sizes = [16, 16], strides = [1, 1]} : vector<16x192xf32> to vector<16x16xf32>
    %15 = arith.truncf %14 : vector<16x16xf32> to vector<16x16xbf16>
    %c0_13 = arith.constant 0 : index
    %c0_14 = arith.constant 0 : index
    %c2 = arith.constant 2 : index
    %c0_15 = arith.constant 0 : index
    %c0_16 = arith.constant 0 : index
    %16 = vector.load %arg4[%c0_13, %c0_14, %c2, %c0_15, %c0_16] : memref<3x1x4x16x16xbf16, #tpu.memory_space<vmem>>, vector<1x1x1x16x16xbf16>
    %17 = vector.shape_cast %16 : vector<1x1x1x16x16xbf16> to vector<16x16xbf16>
    %18 = vector.shape_cast %15 : vector<16x16xbf16> to vector<1x1x1x16x16xbf16>
    tpu.vector_store %arg4[%c0_13, %c0_14, %c2, %c0_15, %c0_16], %18 {strides = array<i32>} : memref<3x1x4x16x16xbf16, #tpu.memory_space<vmem>>, vector<1x1x1x16x16xbf16>,
    %19 = vector.extract_strided_slice %3 {offsets = [0, 48], sizes = [16, 16], strides = [1, 1]} : vector<16x192xf32> to vector<16x16xf32>
    %20 = arith.truncf %19 : vector<16x16xf32> to vector<16x16xbf16>
    %c0_17 = arith.constant 0 : index
    %c0_18 = arith.constant 0 : index
    %c3 = arith.constant 3 : index
    %c0_19 = arith.constant 0 : index
    %c0_20 = arith.constant 0 : index
    %21 = vector.load %arg4[%c0_17, %c0_18, %c3, %c0_19, %c0_20] : memref<3x1x4x16x16xbf16, #tpu.memory_space<vmem>>, vector<1x1x1x16x16xbf16>
    %22 = vector.shape_cast %21 : vector<1x1x1x16x16xbf16> to vector<16x16xbf16>
    %23 = vector.shape_cast %20 : vector<16x16xbf16> to vector<1x1x1x16x16xbf16>
    tpu.vector_store %arg4[%c0_17, %c0_18, %c3, %c0_19, %c0_20], %23 {strides = array<i32>} : memref<3x1x4x16x16xbf16, #tpu.memory_space<vmem>>, vector<1x1x1x16x16xbf16>,
    %24 = vector.extract_strided_slice %3 {offsets = [0, 64], sizes = [16, 16], strides = [1, 1]} : vector<16x192xf32> to vector<16x16xf32>
    %25 = arith.truncf %24 : vector<16x16xf32> to vector<16x16xbf16>
    %c1_21 = arith.constant 1 : index
    %c0_22 = arith.constant 0 : index
    %c0_23 = arith.constant 0 : index
    %c0_24 = arith.constant 0 : index
    %c0_25 = arith.constant 0 : index
    %26 = vector.load %arg4[%c1_21, %c0_22, %c0_23, %c0_24, %c0_25] : memref<3x1x4x16x16xbf16, #tpu.memory_space<vmem>>, vector<1x1x1x16x16xbf16>
    %27 = vector.shape_cast %26 : vector<1x1x1x16x16xbf16> to vector<16x16xbf16>
    %28 = vector.shape_cast %25 : vector<16x16xbf16> to vector<1x1x1x16x16xbf16>
    tpu.vector_store %arg4[%c1_21, %c0_22, %c0_23, %c0_24, %c0_25], %28 {strides = array<i32>} : memref<3x1x4x16x16xbf16, #tpu.memory_space<vmem>>, vector<1x1x1x16x16xbf16>,
    %29 = vector.extract_strided_slice %3 {offsets = [0, 80], sizes = [16, 16], strides = [1, 1]} : vector<16x192xf32> to vector<16x16xf32>
    %30 = arith.truncf %29 : vector<16x16xf32> to vector<16x16xbf16>
    %c1_26 = arith.constant 1 : index
    %c0_27 = arith.constant 0 : index
    %c1_28 = arith.constant 1 : index
    %c0_29 = arith.constant 0 : index
    %c0_30 = arith.constant 0 : index
    %31 = vector.load %arg4[%c1_26, %c0_27, %c1_28, %c0_29, %c0_30] : memref<3x1x4x16x16xbf16, #tpu.memory_space<vmem>>, vector<1x1x1x16x16xbf16>
    %32 = vector.shape_cast %31 : vector<1x1x1x16x16xbf16> to vector<16x16xbf16>
    %33 = vector.shape_cast %30 : vector<16x16xbf16> to vector<1x1x1x16x16xbf16>
    tpu.vector_store %arg4[%c1_26, %c0_27, %c1_28, %c0_29, %c0_30], %33 {strides = array<i32>} : memref<3x1x4x16x16xbf16, #tpu.memory_space<vmem>>, vector<1x1x1x16x16xbf16>,
    %34 = vector.extract_strided_slice %3 {offsets = [0, 96], sizes = [16, 16], strides = [1, 1]} : vector<16x192xf32> to vector<16x16xf32>
    %35 = arith.truncf %34 : vector<16x16xf32> to vector<16x16xbf16>
    %c1_31 = arith.constant 1 : index
    %c0_32 = arith.constant 0 : index
    %c2_33 = arith.constant 2 : index
    %c0_34 = arith.constant 0 : index
    %c0_35 = arith.constant 0 : index
    %36 = vector.load %arg4[%c1_31, %c0_32, %c2_33, %c0_34, %c0_35] : memref<3x1x4x16x16xbf16, #tpu.memory_space<vmem>>, vector<1x1x1x16x16xbf16>
    %37 = vector.shape_cast %36 : vector<1x1x1x16x16xbf16> to vector<16x16xbf16>
    %38 = vector.shape_cast %35 : vector<16x16xbf16> to vector<1x1x1x16x16xbf16>
    tpu.vector_store %arg4[%c1_31, %c0_32, %c2_33, %c0_34, %c0_35], %38 {strides = array<i32>} : memref<3x1x4x16x16xbf16, #tpu.memory_space<vmem>>, vector<1x1x1x16x16xbf16>,
    %39 = vector.extract_strided_slice %3 {offsets = [0, 112], sizes = [16, 16], strides = [1, 1]} : vector<16x192xf32> to vector<16x16xf32>
    %40 = arith.truncf %39 : vector<16x16xf32> to vector<16x16xbf16>
    %c1_36 = arith.constant 1 : index
    %c0_37 = arith.constant 0 : index
    %c3_38 = arith.constant 3 : index
    %c0_39 = arith.constant 0 : index
    %c0_40 = arith.constant 0 : index
    %41 = vector.load %arg4[%c1_36, %c0_37, %c3_38, %c0_39, %c0_40] : memref<3x1x4x16x16xbf16, #tpu.memory_space<vmem>>, vector<1x1x1x16x16xbf16>
    %42 = vector.shape_cast %41 : vector<1x1x1x16x16xbf16> to vector<16x16xbf16>
    %43 = vector.shape_cast %40 : vector<16x16xbf16> to vector<1x1x1x16x16xbf16>
    tpu.vector_store %arg4[%c1_36, %c0_37, %c3_38, %c0_39, %c0_40], %43 {strides = array<i32>} : memref<3x1x4x16x16xbf16, #tpu.memory_space<vmem>>, vector<1x1x1x16x16xbf16>,
    %44 = vector.extract_strided_slice %3 {offsets = [0, 128], sizes = [16, 16], strides = [1, 1]} : vector<16x192xf32> to vector<16x16xf32>
    %45 = arith.truncf %44 : vector<16x16xf32> to vector<16x16xbf16>
    %c2_41 = arith.constant 2 : index
    %c0_42 = arith.constant 0 : index
    %c0_43 = arith.constant 0 : index
    %c0_44 = arith.constant 0 : index
    %c0_45 = arith.constant 0 : index
    %46 = vector.load %arg4[%c2_41, %c0_42, %c0_43, %c0_44, %c0_45] : memref<3x1x4x16x16xbf16, #tpu.memory_space<vmem>>, vector<1x1x1x16x16xbf16>
    %47 = vector.shape_cast %46 : vector<1x1x1x16x16xbf16> to vector<16x16xbf16>
    %48 = vector.shape_cast %45 : vector<16x16xbf16> to vector<1x1x1x16x16xbf16>
    tpu.vector_store %arg4[%c2_41, %c0_42, %c0_43, %c0_44, %c0_45], %48 {strides = array<i32>} : memref<3x1x4x16x16xbf16, #tpu.memory_space<vmem>>, vector<1x1x1x16x16xbf16>,
    %49 = vector.extract_strided_slice %3 {offsets = [0, 144], sizes = [16, 16], strides = [1, 1]} : vector<16x192xf32> to vector<16x16xf32>
    %50 = arith.truncf %49 : vector<16x16xf32> to vector<16x16xbf16>
    %c2_46 = arith.constant 2 : index
    %c0_47 = arith.constant 0 : index
    %c1_48 = arith.constant 1 : index
    %c0_49 = arith.constant 0 : index
    %c0_50 = arith.constant 0 : index
    %51 = vector.load %arg4[%c2_46, %c0_47, %c1_48, %c0_49, %c0_50] : memref<3x1x4x16x16xbf16, #tpu.memory_space<vmem>>, vector<1x1x1x16x16xbf16>
    %52 = vector.shape_cast %51 : vector<1x1x1x16x16xbf16> to vector<16x16xbf16>
    %53 = vector.shape_cast %50 : vector<16x16xbf16> to vector<1x1x1x16x16xbf16>
    tpu.vector_store %arg4[%c2_46, %c0_47, %c1_48, %c0_49, %c0_50], %53 {strides = array<i32>} : memref<3x1x4x16x16xbf16, #tpu.memory_space<vmem>>, vector<1x1x1x16x16xbf16>,
    %54 = vector.extract_strided_slice %3 {offsets = [0, 160], sizes = [16, 16], strides = [1, 1]} : vector<16x192xf32> to vector<16x16xf32>
    %55 = arith.truncf %54 : vector<16x16xf32> to vector<16x16xbf16>
    %c2_51 = arith.constant 2 : index
    %c0_52 = arith.constant 0 : index
    %c2_53 = arith.constant 2 : index
    %c0_54 = arith.constant 0 : index
    %c0_55 = arith.constant 0 : index
    %56 = vector.load %arg4[%c2_51, %c0_52, %c2_53, %c0_54, %c0_55] : memref<3x1x4x16x16xbf16, #tpu.memory_space<vmem>>, vector<1x1x1x16x16xbf16>
    %57 = vector.shape_cast %56 : vector<1x1x1x16x16xbf16> to vector<16x16xbf16>
    %58 = vector.shape_cast %55 : vector<16x16xbf16> to vector<1x1x1x16x16xbf16>
    tpu.vector_store %arg4[%c2_51, %c0_52, %c2_53, %c0_54, %c0_55], %58 {strides = array<i32>} : memref<3x1x4x16x16xbf16, #tpu.memory_space<vmem>>, vector<1x1x1x16x16xbf16>,
    %59 = vector.extract_strided_slice %3 {offsets = [0, 176], sizes = [16, 16], strides = [1, 1]} : vector<16x192xf32> to vector<16x16xf32>
    %60 = arith.truncf %59 : vector<16x16xf32> to vector<16x16xbf16>
    %c2_56 = arith.constant 2 : index
    %c0_57 = arith.constant 0 : index
    %c3_58 = arith.constant 3 : index
    %c0_59 = arith.constant 0 : index
    %c0_60 = arith.constant 0 : index
    %61 = vector.load %arg4[%c2_56, %c0_57, %c3_58, %c0_59, %c0_60] : memref<3x1x4x16x16xbf16, #tpu.memory_space<vmem>>, vector<1x1x1x16x16xbf16>
    %62 = vector.shape_cast %61 : vector<1x1x1x16x16xbf16> to vector<16x16xbf16>
    %63 = vector.shape_cast %60 : vector<16x16xbf16> to vector<1x1x1x16x16xbf16>
    tpu.vector_store %arg4[%c2_56, %c0_57, %c3_58, %c0_59, %c0_60], %63 {strides = array<i32>} : memref<3x1x4x16x16xbf16, #tpu.memory_space<vmem>>, vector<1x1x1x16x16xbf16>,
    return
  }
  func.func @transform_0(%arg0: i32, %arg1: i32) -> (i32, i32, i32) {
    %c0_i32 = arith.constant 0 : i32
    %c0_i32_0 = arith.constant 0 : i32
    return %arg0, %arg1, %c0_i32 : i32, i32, i32
  }
  func.func @transform_1(%arg0: i32, %arg1: i32) -> (i32, i32) {
    %c0_i32 = arith.constant 0 : i32
    %c0_i32_0 = arith.constant 0 : i32
    %c0_i32_1 = arith.constant 0 : i32
    return %c0_i32, %c0_i32_0 : i32, i32
  }
  func.func @transform_2(%arg0: i32, %arg1: i32) -> (i32, i32, i32, i32, i32) {
    %c0_i32 = arith.constant 0 : i32
    %c0_i32_0 = arith.constant 0 : i32
    %c0_i32_1 = arith.constant 0 : i32
    %c0_i32_2 = arith.constant 0 : i32
    return %c0_i32, %arg0, %c0_i32_0, %arg1, %c0_i32_1 : i32, i32, i32, i32, i32
  }
}

</mosaic_0001>

<llo_original>
// kernel: attention_forward.5
$region0: #{attention_forward.5}
  #allocation0 [shape = 'u32[]', space=smem, size = 0x4, offset = 0x4, fixed_abs, tag = 'smem constant byte address 0x4 - core index']
  #allocation1 [shape = 'u32[72,128]{1,0:T(1,128)}', space=vmem, size = 0x9000, scoped, tag = 'internal scratch']
  %s0 = inlined_call_operand.vmem [shape: bf16[2,16,64], index: 0, kind: input, shape index: {}]
  %s1 = inlined_call_operand.vmem [shape: bf16[64,64], index: 1, kind: input, shape index: {}]
  %s2 = inlined_call_operand.vmem [shape: f32[1,64], index: 2, kind: input, shape index: {}]
  %s3 = inlined_call_operand.vmem [shape: f32[2,16,64], index: 3, kind: output, shape index: {}]
  %s4 = sld [smem:[#allocation0]]
  $region45: #{attention_forward.5} parent=0
    _
  %s6 = ssub.s32 1, %s4
  %s7 = scalar_select 0, %s6, %s4
  loop: start=0, step=1, limit=4
  $region2: #{attention_forward.5} parent=0 // loop_pre_header
    _
  $region3: #{attention_forward.5} parent=0 // loop_header
    %s9 = sphi 0, %s13
    %p10 = scmp.ge.s32.totalorder %s9, 4
    %s16 = sphi 0, %s28
    %s17 = sphi 0, %s24
    %s18 = sphi 0, %s16
    %s19 = sphi 0, %s17
    %s20 = sphi 0, %s18
    %s21 = sphi 0, %s19
    %s33 = sphi 0, %s35
    %s36 = sphi 0, %s33
    %s37 = sphi 0, %s36
    %s53 = sphi 0, %s37
    %s57 = sphi 0, %s57
    %s59 = sphi 0, %s57
    %s60 = sphi 0, %s59
    %s74 = sphi 0, %s60
    %s78 = sphi 0, %s78
    %s80 = sphi 0, %s78
    %s81 = sphi 0, %s80
    %s95 = sphi 0, %s81
    %s103 = sphi 0, %s105
    %s106 = sphi 0, %s103
    %s107 = sphi 0, %s106
    %s123 = sphi 0, %s107
  $region4: #{attention_forward.5} parent=0 // loop_header_branch
    %12 = sbr.rel (%p10) target = $region8
  $region5: #{attention_forward.5} parent=0 // loop_body
    %s14 = ssub.s32 %s9, 1
    %s15 = ssub.s32 %s9, 2
    %s22 = sadd.s32 1, %s17
    %p23 = scmp.ge.s32.totalorder %s22, 1
    %s24 = scalar_select %p23, 0, %s22
    %s25 = sadd.s32 1, %s16
    %s26 = scalar_select %p23, %s25, %s16
    %p27 = scmp.ge.s32.totalorder %s26, 2
    %s28 = scalar_select %p27, 0, %s26
    %s29 = ssub.s32 %s16, %s28
    %s30 = ssub.s32 %s17, %s24
    %s31 = sor.u32 %s29, %s30
    %p32 = scmp.eq.s32.totalorder %s31, 0
    %s34 = sadd.s32 %s33, 1
    %s35 = scalar_select %p32, %s33, %s34
    %p38 = pneg %p32
    %p39 = scmp.eq.s32.totalorder %s9, 1
    %p40 = por %p38, %p39
    %p41 = scmp.ne.s32.totalorder %s33, %s36
    %p42 = scmp.eq.s32.totalorder %s9, 0
    %p43 = por %p41, %p42
    %p44 = scmp.ne.s32.totalorder %s33, %s36
    %p45 = scmp.eq.s32.totalorder %s14, 1
    %p46 = por %p44, %p45
    %p47 = scmp.ne.s32.totalorder %s36, %s37
    %p48 = scmp.eq.s32.totalorder %s14, 0
    %p49 = por %p47, %p48
    %p50 = scmp.ne.s32.totalorder %s36, %s37
    %p51 = scmp.eq.s32.totalorder %s15, 1
    %p52 = por %p50, %p51
    %p54 = scmp.ne.s32.totalorder %s37, %s53
    %p55 = scmp.eq.s32.totalorder %s15, 0
    %p56 = por %p54, %p55
    %s58 = sadd.s32 %s57, 1
    %p61 = scmp.eq.s32.totalorder %s9, 1
    %p62 = scmp.ne.s32.totalorder %s57, %s59
    %p63 = scmp.eq.s32.totalorder %s9, 0
    %p64 = por %p62, %p63
    %p65 = scmp.ne.s32.totalorder %s57, %s59
    %p66 = scmp.eq.s32.totalorder %s14, 1
    %p67 = por %p65, %p66
    %p68 = scmp.ne.s32.totalorder %s59, %s60
    %p69 = scmp.eq.s32.totalorder %s14, 0
    %p70 = por %p68, %p69
    %p71 = scmp.ne.s32.totalorder %s59, %s60
    %p72 = scmp.eq.s32.totalorder %s15, 1
    %p73 = por %p71, %p72
    %p75 = scmp.ne.s32.totalorder %s60, %s74
    %p76 = scmp.eq.s32.totalorder %s15, 0
    %p77 = por %p75, %p76
    %s79 = sadd.s32 %s78, 1
    %p82 = scmp.eq.s32.totalorder %s9, 1
    %p83 = scmp.ne.s32.totalorder %s78, %s80
    %p84 = scmp.eq.s32.totalorder %s9, 0
    %p85 = por %p83, %p84
    %p86 = scmp.ne.s32.totalorder %s78, %s80
    %p87 = scmp.eq.s32.totalorder %s14, 1
    %p88 = por %p86, %p87
    %p89 = scmp.ne.s32.totalorder %s80, %s81
    %p90 = scmp.eq.s32.totalorder %s14, 0
    %p91 = por %p89, %p90
    %p92 = scmp.ne.s32.totalorder %s80, %s81
    %p93 = scmp.eq.s32.totalorder %s15, 1
    %p94 = por %p92, %p93
    %p96 = scmp.ne.s32.totalorder %s81, %s95
    %p97 = scmp.eq.s32.totalorder %s15, 0
    %p98 = por %p96, %p97
    %s99 = ssub.s32 %s16, %s28
    %s100 = ssub.s32 %s17, %s24
    %s101 = sor.u32 %s99, %s100
    %p102 = scmp.eq.s32.totalorder %s101, 0
    %s104 = sadd.s32 %s103, 1
    %s105 = scalar_select %p102, %s103, %s104
    %p108 = pneg %p102
    %p109 = scmp.eq.s32.totalorder %s9, 1
    %p110 = por %p108, %p109
    %p111 = scmp.ne.s32.totalorder %s103, %s106
    %p112 = scmp.eq.s32.totalorder %s9, 0
    %p113 = por %p111, %p112
    %p114 = scmp.ne.s32.totalorder %s103, %s106
    %p115 = scmp.eq.s32.totalorder %s14, 1
    %p116 = por %p114, %p115
    %p117 = scmp.ne.s32.totalorder %s106, %s107
    %p118 = scmp.eq.s32.totalorder %s14, 0
    %p119 = por %p117, %p118
    %p120 = scmp.ne.s32.totalorder %s106, %s107
    %p121 = scmp.eq.s32.totalorder %s15, 1
    %p122 = por %p120, %p121
    %p124 = scmp.ne.s32.totalorder %s107, %s123
    %p125 = scmp.eq.s32.totalorder %s15, 0
    %p126 = por %p124, %p125
    %p127 = scmp.le.s32.totalorder 1, %s9
    %p128 = scmp.lt.s32.totalorder %s9, 3
    %p129 = pnand %p127, %p128
    %p130 = pneg %p129
    // Predicated region
    $region9: #{attention_forward.5} parent=5 // pred_check
      _
    $region10: #{attention_forward.5} parent=5 // pred_check_branch
      %132 = sbr.rel (%p129) target = $region12
    $region11: #{attention_forward.5} parent=5 // pred_region
      %s133 = ssub.s32 %s9, 1
      // Predicated region
      $region13: #{attention_forward.5} parent=11 // pred_check
        %p134 = pneg %p70
      $region14: #{attention_forward.5} parent=11 // pred_check_branch
        %136 = sbr.rel (%p134) target = $region16
      $region15: #{attention_forward.5} parent=11 // pred_region
        _
      $region16: #{attention_forward.5} parent=11 // pred_fallthru
        _
      // Predicated region
      $region17: #{attention_forward.5} parent=11 // pred_check
        %p137 = pneg %p91
      $region18: #{attention_forward.5} parent=11 // pred_check_branch
        %139 = sbr.rel (%p137) target = $region20
      $region19: #{attention_forward.5} parent=11 // pred_region
        _
      $region20: #{attention_forward.5} parent=11 // pred_fallthru
        _
    $region12: #{attention_forward.5} parent=5 // pred_fallthru
      _
    %p140 = scmp.lt.s32.totalorder %s9, 2
    // Predicated region
    $region21: #{attention_forward.5} parent=5 // pred_check
      %p141 = pneg %p140
    $region22: #{attention_forward.5} parent=5 // pred_check_branch
      %143 = sbr.rel (%p141) target = $region24
    $region23: #{attention_forward.5} parent=5 // pred_region
      // Predicated region
      $region25: #{attention_forward.5} parent=23 // pred_check
        %p144 = pneg %p43
      $region26: #{attention_forward.5} parent=23 // pred_check_branch
        %146 = sbr.rel (%p144) target = $region28
      $region27: #{attention_forward.5} parent=23 // pred_region
        %s147 = smul.u32 2, %s17
        %p148 = scmp.lt.s32.totalorder %s16, 1
        %s149 = scalar_select %p148, %s16, 1
        %p150 = scmp.lt.s32.totalorder %s147, 1
        %s151 = scalar_select %p150, %s147, 1
        %s152 = smul.addr %s149, 2
        %s153 = sadd.s32 %s151, %s152
        %s154 = smul.addr %s153, 4
        %s155 = scalar_lea.vmem %s0, %s154
        %s156 = smul.u32 2, %s17
      $region28: #{attention_forward.5} parent=23 // pred_fallthru
        _
    $region24: #{attention_forward.5} parent=5 // pred_fallthru
      _
    %p157 = scmp.le.s32.totalorder 1, %s9
    %p158 = scmp.lt.s32.totalorder %s9, 3
    %p159 = pnand %p157, %p158
    %p160 = pneg %p159
    // Predicated region
    $region29: #{attention_forward.5} parent=5 // pred_check
      _
    $region30: #{attention_forward.5} parent=5 // pred_check_branch
      %162 = sbr.rel (%p159) target = $region32
    $region31: #{attention_forward.5} parent=5 // pred_region
      %s163 = ssub.s32 %s9, 1
      %s164 = smul.u32 2, %s19
      %p165 = scmp.lt.s32.totalorder %s18, 1
      %s166 = scalar_select %p165, %s18, 1
      %p167 = scmp.lt.s32.totalorder %s164, 1
      %s168 = scalar_select %p167, %s164, 1
      %s169 = smul.addr %s166, 2
      %s170 = sadd.s32 %s168, %s169
      %s171 = smul.addr %s170, 4
      %s172 = scalar_lea.vmem %s0, %s171
      %p173 = pneg %p49
      %p174 = pneg %p46
      %p175 = pneg %p70
      %p176 = pneg %p67
      %p177 = pneg %p91
      %p178 = pneg %p88
      %p179 = pneg %p119
      %p180 = pneg %p116
      %s181 = smul.u32 2, %s19
      %p182 = scmp.lt.s32.totalorder %s18, 1
      %s183 = scalar_select %p182, %s18, 1
      %p184 = scmp.lt.s32.totalorder %s181, 1
      %s185 = scalar_select %p184, %s181, 1
      %s186 = smul.addr %s183, 2
      %s187 = sadd.s32 %s185, %s186
      %s188 = smul.addr %s187, 8
      %s189 = scalar_lea.vmem %s3, %s188
      %s190 = smul.u32 2, %s19
      %p191 = scmp.lt.s32.totalorder %s18, 1
      %s192 = scalar_select %p191, %s18, 1
      %p193 = scmp.lt.s32.totalorder %s190, 1
      %s194 = scalar_select %p193, %s190, 1
      %s195 = smul.addr %s192, 2
      %s196 = sadd.s32 %s194, %s195
      %s197 = smul.addr %s196, 4
      %s198 = scalar_lea.vmem %s0, %s197
      %s199 = smul.u32 2, %s19
      %s200 = smul.u32 2, %s19
      %p201 = scmp.lt.s32.totalorder %s18, 1
      %s202 = scalar_select %p201, %s18, 1
      %p203 = scmp.lt.s32.totalorder %s200, 1
      %s204 = scalar_select %p203, %s200, 1
      %s205 = smul.addr %s202, 2
      %s206 = sadd.s32 %s204, %s205
      %s207 = smul.addr %s206, 8
      %s208 = scalar_lea.vmem %s3, %s207
      %s209 = smul.u32 2, %s19
      %v211 = vld [vmem:[%s198] sm:$0xf]
      %v212 = vld [vmem:[%s198 + $0x4] sm:$0xf]
      %v213 = vld [vmem:[%s1] sm:$0xf]
      %v214 = vld [vmem:[%s1 + $0x4] sm:$0xf]
      %v215 = vld [vmem:[%s1 + $0x8] sm:$0xf]
      %v216 = vld [vmem:[%s1 + $0xc] sm:$0xf]
      %v217 = vld [vmem:[%s1 + $0x10] sm:$0xf]
      %v218 = vld [vmem:[%s1 + $0x14] sm:$0xf]
      %v219 = vld [vmem:[%s1 + $0x18] sm:$0xf]
      %v220 = vld [vmem:[%s1 + $0x1c] sm:$0xf]
      %v221 = vld [vmem:[%s2] sm:$0x1]
      %v223 = vperm.slane %v221, 0
      %v227 = vunpack.c.l.b16 %v211
      %v228 = vunpack.c.l.b16 %v212
      %v229 = vpack.c.b16 %v228, %v227
      %v238 = vunpack.c.l.b16 %v213
      %v239 = vunpack.c.l.b16 %v214
      %v240 = vunpack.c.l.b16 %v215
      %v241 = vunpack.c.l.b16 %v216
      %v242 = vunpack.c.l.b16 %v217
      %v243 = vunpack.c.l.b16 %v218
      %v244 = vunpack.c.l.b16 %v219
      %v245 = vunpack.c.l.b16 %v220
      %v246 = vpack.c.b16 %v239, %v238
      %v247 = vpack.c.b16 %v241, %v240
      %v248 = vpack.c.b16 %v243, %v242
      %v249 = vpack.c.b16 %v245, %v244
      %vm254 = vcmask 523264
      %v256 = vsel %vm254, %v229, 0
      %258 = vmatpush.bf16.msra.mxu0 0
      %259 = vmatpush.bf16.msra.mxu0 0
      %260 = vmatpush.bf16.msra.mxu0 0
      %261 = vmatpush.bf16.msra.mxu0 0
      %262 = vmatpush.bf16.msra.mxu0 %v249
      %263 = vmatpush.bf16.msra.mxu0 %v248
      %264 = vmatpush.bf16.msra.mxu0 %v247
      %265 = vmatpush.bf16.msra.mxu0 %v246
      %266 = vmatmul.bf16.gmra.mxu0 %v256
      %v267 = vpop.f32.mrf.mxu0
      %v268 = vadd.f32 %v223, %v267
      %v269 = vpop.f32.mrf.mxu0
      %v270 = vadd.f32 %v223, %v269
      %271 = vdwg.mxu0
      %272 = vst.msk [vmem:[%s208] sm:$0xff] %vm254, %v268
      %273 = vst.msk [vmem:[%s208 + $0x8] sm:$0xff] %vm254, %v270
      %s274 = smul.u32 2, %s19
      %p275 = scmp.lt.s32.totalorder %s18, 1
      %s276 = scalar_select %p275, %s18, 1
      %p277 = scmp.lt.s32.totalorder %s274, 1
      %s278 = scalar_select %p277, %s274, 1
      %s279 = smul.addr %s276, 2
      %s280 = sadd.s32 %s278, %s279
      %s281 = smul.addr %s280, 8
      %s282 = scalar_lea.vmem %s3, %s281
      // Predicated region
      $region33: #{attention_forward.5} parent=31 // pred_check
        %p283 = pneg %p116
      $region34: #{attention_forward.5} parent=31 // pred_check_branch
        %285 = sbr.rel (%p283) target = $region36
      $region35: #{attention_forward.5} parent=31 // pred_region
        %s286 = smul.u32 2, %s19
      $region36: #{attention_forward.5} parent=31 // pred_fallthru
        _
    $region32: #{attention_forward.5} parent=5 // pred_fallthru
      _
    %p287 = scmp.le.s32.totalorder 2, %s9
    // Predicated region
    $region37: #{attention_forward.5} parent=5 // pred_check
      %p288 = pneg %p287
    $region38: #{attention_forward.5} parent=5 // pred_check_branch
      %290 = sbr.rel (%p288) target = $region40
    $region39: #{attention_forward.5} parent=5 // pred_region
      %s291 = ssub.s32 %s9, 2
      // Predicated region
      $region41: #{attention_forward.5} parent=39 // pred_check
        %p292 = pneg %p122
      $region42: #{attention_forward.5} parent=39 // pred_check_branch
        %294 = sbr.rel (%p292) target = $region44
      $region43: #{attention_forward.5} parent=39 // pred_region
        %s295 = smul.u32 2, %s21
        %p296 = scmp.lt.s32.totalorder %s20, 1
        %s297 = scalar_select %p296, %s20, 1
        %p298 = scmp.lt.s32.totalorder %s295, 1
        %s299 = scalar_select %p298, %s295, 1
        %s300 = smul.addr %s297, 2
        %s301 = sadd.s32 %s299, %s300
        %s302 = smul.addr %s301, 8
        %s303 = scalar_lea.vmem %s3, %s302
      $region44: #{attention_forward.5} parent=39 // pred_fallthru
        _
    $region40: #{attention_forward.5} parent=5 // pred_fallthru
      _
  $region6: #{attention_forward.5} parent=0 // loop_footer
    %s13 = sadd.s32 1, %s9
  $region7: #{attention_forward.5} parent=0 // loop_footer_branch
    %8 = sbr.rel target = $region3
  $region8: #{attention_forward.5} parent=0 // loop_exit
    _

// kernel: attention_forward.3
$region0: #{attention_forward.3}
  #allocation0 [shape = 'u32[]', space=smem, size = 0x4, offset = 0x4, fixed_abs, tag = 'smem constant byte address 0x4 - core index']
  #allocation1 [shape = 'u32[72,128]{1,0:T(1,128)}', space=vmem, size = 0x9000, scoped, tag = 'internal scratch']
  %s0 = inlined_call_operand.vmem [shape: bf16[2,16,64], index: 0, kind: input, shape index: {}]
  %s1 = inlined_call_operand.vmem [shape: bf16[64,192], index: 1, kind: input, shape index: {}]
  %s2 = inlined_call_operand.vmem [shape: bf16[3,2,4,16,16], index: 2, kind: output, shape index: {}]
  %s3 = sld [smem:[#allocation0]]
  $region78: #{attention_forward.3} parent=0
    _
  %s5 = ssub.s32 1, %s3
  %s6 = scalar_select 0, %s5, %s3
  $region1: #{attention_forward.3} parent=0
    #allocation2 [shape = 'u8[98304]{0}', space=vmem, size = 0x18000, scoped, tag = 'output window, operand 0']
    loop: start=0, step=1, limit=4
    $region2: #{attention_forward.3} parent=1 // loop_pre_header
      _
    $region3: #{attention_forward.3} parent=1 // loop_header
      %s8 = sphi 0, %s12
      %p9 = scmp.ge.s32.totalorder %s8, 4
      %s15 = sphi 0, %s27
      %s16 = sphi 0, %s23
      %s17 = sphi 0, %s15
      %s18 = sphi 0, %s16
      %s19 = sphi 0, %s17
      %s20 = sphi 0, %s18
      %s32 = sphi 0, %s34
      %s35 = sphi 0, %s32
      %s36 = sphi 0, %s35
      %s52 = sphi 0, %s36
      %s56 = sphi 0, %s56
      %s58 = sphi 0, %s56
      %s59 = sphi 0, %s58
      %s73 = sphi 0, %s59
      %s81 = sphi 0, %s83
      %s84 = sphi 0, %s81
      %s85 = sphi 0, %s84
      %s101 = sphi 0, %s85
    $region4: #{attention_forward.3} parent=1 // loop_header_branch
      %11 = sbr.rel (%p9) target = $region8
    $region5: #{attention_forward.3} parent=1 // loop_body
      %s13 = ssub.s32 %s8, 1
      %s14 = ssub.s32 %s8, 2
      %s21 = sadd.s32 1, %s16
      %p22 = scmp.ge.s32.totalorder %s21, 1
      %s23 = scalar_select %p22, 0, %s21
      %s24 = sadd.s32 1, %s15
      %s25 = scalar_select %p22, %s24, %s15
      %p26 = scmp.ge.s32.totalorder %s25, 2
      %s27 = scalar_select %p26, 0, %s25
      %s28 = ssub.s32 %s15, %s27
      %s29 = ssub.s32 %s16, %s23
      %s30 = sor.u32 %s28, %s29
      %p31 = scmp.eq.s32.totalorder %s30, 0
      %s33 = sadd.s32 %s32, 1
      %s34 = scalar_select %p31, %s32, %s33
      %p37 = pneg %p31
      %p38 = scmp.eq.s32.totalorder %s8, 1
      %p39 = por %p37, %p38
      %p40 = scmp.ne.s32.totalorder %s32, %s35
      %p41 = scmp.eq.s32.totalorder %s8, 0
      %p42 = por %p40, %p41
      %p43 = scmp.ne.s32.totalorder %s32, %s35
      %p44 = scmp.eq.s32.totalorder %s13, 1
      %p45 = por %p43, %p44
      %p46 = scmp.ne.s32.totalorder %s35, %s36
      %p47 = scmp.eq.s32.totalorder %s13, 0
      %p48 = por %p46, %p47
      %p49 = scmp.ne.s32.totalorder %s35, %s36
      %p50 = scmp.eq.s32.totalorder %s14, 1
      %p51 = por %p49, %p50
      %p53 = scmp.ne.s32.totalorder %s36, %s52
      %p54 = scmp.eq.s32.totalorder %s14, 0
      %p55 = por %p53, %p54
      %s57 = sadd.s32 %s56, 1
      %p60 = scmp.eq.s32.totalorder %s8, 1
      %p61 = scmp.ne.s32.totalorder %s56, %s58
      %p62 = scmp.eq.s32.totalorder %s8, 0
      %p63 = por %p61, %p62
      %p64 = scmp.ne.s32.totalorder %s56, %s58
      %p65 = scmp.eq.s32.totalorder %s13, 1
      %p66 = por %p64, %p65
      %p67 = scmp.ne.s32.totalorder %s58, %s59
      %p68 = scmp.eq.s32.totalorder %s13, 0
      %p69 = por %p67, %p68
      %p70 = scmp.ne.s32.totalorder %s58, %s59
      %p71 = scmp.eq.s32.totalorder %s14, 1
      %p72 = por %p70, %p71
      %p74 = scmp.ne.s32.totalorder %s59, %s73
      %p75 = scmp.eq.s32.totalorder %s14, 0
      %p76 = por %p74, %p75
      %s77 = ssub.s32 %s15, %s27
      %s78 = ssub.s32 %s16, %s23
      %s79 = sor.u32 %s77, %s78
      %p80 = scmp.eq.s32.totalorder %s79, 0
      %s82 = sadd.s32 %s81, 1
      %s83 = scalar_select %p80, %s81, %s82
      %p86 = pneg %p80
      %p87 = scmp.eq.s32.totalorder %s8, 1
      %p88 = por %p86, %p87
      %p89 = scmp.ne.s32.totalorder %s81, %s84
      %p90 = scmp.eq.s32.totalorder %s8, 0
      %p91 = por %p89, %p90
      %p92 = scmp.ne.s32.totalorder %s81, %s84
      %p93 = scmp.eq.s32.totalorder %s13, 1
      %p94 = por %p92, %p93
      %p95 = scmp.ne.s32.totalorder %s84, %s85
      %p96 = scmp.eq.s32.totalorder %s13, 0
      %p97 = por %p95, %p96
      %p98 = scmp.ne.s32.totalorder %s84, %s85
      %p99 = scmp.eq.s32.totalorder %s14, 1
      %p100 = por %p98, %p99
      %p102 = scmp.ne.s32.totalorder %s85, %s101
      %p103 = scmp.eq.s32.totalorder %s14, 0
      %p104 = por %p102, %p103
      %p105 = scmp.le.s32.totalorder 1, %s8
      %p106 = scmp.lt.s32.totalorder %s8, 3
      %p107 = pnand %p105, %p106
      %p108 = pneg %p107
      // Predicated region
      $region9: #{attention_forward.3} parent=5 // pred_check
        _
      $region10: #{attention_forward.3} parent=5 // pred_check_branch
        %110 = sbr.rel (%p107) target = $region12
      $region11: #{attention_forward.3} parent=5 // pred_region
        %s111 = ssub.s32 %s8, 1
        // Predicated region
        $region13: #{attention_forward.3} parent=11 // pred_check
          %p112 = pneg %p69
        $region14: #{attention_forward.3} parent=11 // pred_check_branch
          %114 = sbr.rel (%p112) target = $region16
        $region15: #{attention_forward.3} parent=11 // pred_region
          _
        $region16: #{attention_forward.3} parent=11 // pred_fallthru
          _
      $region12: #{attention_forward.3} parent=5 // pred_fallthru
        _
      %p115 = scmp.lt.s32.totalorder %s8, 2
      // Predicated region
      $region17: #{attention_forward.3} parent=5 // pred_check
        %p116 = pneg %p115
      $region18: #{attention_forward.3} parent=5 // pred_check_branch
        %118 = sbr.rel (%p116) target = $region20
      $region19: #{attention_forward.3} parent=5 // pred_region
        // Predicated region
        $region21: #{attention_forward.3} parent=19 // pred_check
          %p119 = pneg %p42
        $region22: #{attention_forward.3} parent=19 // pred_check_branch
          %121 = sbr.rel (%p119) target = $region24
        $region23: #{attention_forward.3} parent=19 // pred_region
          %s122 = smul.u32 2, %s16
          %p123 = scmp.lt.s32.totalorder %s15, 1
          %s124 = scalar_select %p123, %s15, 1
          %p125 = scmp.lt.s32.totalorder %s122, 1
          %s126 = scalar_select %p125, %s122, 1
          %s127 = smul.addr %s124, 2
          %s128 = sadd.s32 %s126, %s127
          %s129 = smul.addr %s128, 4
          %s130 = scalar_lea.vmem %s0, %s129
          %s131 = smul.u32 2, %s16
        $region24: #{attention_forward.3} parent=19 // pred_fallthru
          _
      $region20: #{attention_forward.3} parent=5 // pred_fallthru
        _
      %p132 = scmp.le.s32.totalorder 1, %s8
      %p133 = scmp.lt.s32.totalorder %s8, 3
      %p134 = pnand %p132, %p133
      %p135 = pneg %p134
      // Predicated region
      $region25: #{attention_forward.3} parent=5 // pred_check
        _
      $region26: #{attention_forward.3} parent=5 // pred_check_branch
        %137 = sbr.rel (%p134) target = $region28
      $region27: #{attention_forward.3} parent=5 // pred_region
        %s138 = ssub.s32 %s8, 1
        %s139 = smul.u32 2, %s18
        %p140 = scmp.lt.s32.totalorder %s17, 1
        %s141 = scalar_select %p140, %s17, 1
        %p142 = scmp.lt.s32.totalorder %s139, 1
        %s143 = scalar_select %p142, %s139, 1
        %s144 = smul.addr %s141, 2
        %s145 = sadd.s32 %s143, %s144
        %s146 = smul.addr %s145, 4
        %s147 = scalar_lea.vmem %s0, %s146
        %p148 = pneg %p48
        %p149 = pneg %p45
        %p150 = pneg %p69
        %p151 = pneg %p66
        %p152 = pneg %p97
        %p153 = pneg %p94
        %s154 = sand.u32 %s84, 1
        %s155 = sand.u32 %s84, 1
        %s156 = smul.addr %s155, 96
        %s157 = scalar_lea.vmem [#allocation2], %s156
        %s158 = smul.u32 2, %s18
        %p159 = scmp.lt.s32.totalorder %s17, 1
        %s160 = scalar_select %p159, %s17, 1
        %p161 = scmp.lt.s32.totalorder %s158, 1
        %s162 = scalar_select %p161, %s158, 1
        %s163 = smul.addr %s160, 2
        %s164 = sadd.s32 %s162, %s163
        %s165 = smul.addr %s164, 4
        %s166 = scalar_lea.vmem %s0, %s165
        %s167 = smul.u32 2, %s18
        %s168 = smul.u32 2, %s18
        %v170 = vld [vmem:[%s166] sm:$0xf]
        %v171 = vld [vmem:[%s166 + $0x4] sm:$0xf]
        %v172 = vld [vmem:[%s1] sm:$0xff]
        %v173 = vld [vmem:[%s1 + $0x8] sm:$0xff]
        %v174 = vld [vmem:[%s1 + $0x10] sm:$0xff]
        %v175 = vld [vmem:[%s1 + $0x18] sm:$0xff]
        %v176 = vld [vmem:[%s1 + $0x20] sm:$0xff]
        %v177 = vld [vmem:[%s1 + $0x28] sm:$0xff]
        %v178 = vld [vmem:[%s1 + $0x30] sm:$0xff]
        %v179 = vld [vmem:[%s1 + $0x38] sm:$0xff]
        %v182 = vunpack.c.l.b16 %v170
        %v183 = vunpack.c.l.b16 %v171
        %v184 = vpack.c.b16 %v183, %v182
        %v193 = vunpack.c.l.b16 %v172
        %v194 = vunpack.c.h.b16 %v172
        %v195 = vunpack.c.l.b16 %v173
        %v196 = vunpack.c.h.b16 %v173
        %v197 = vunpack.c.l.b16 %v174
        %v198 = vunpack.c.h.b16 %v174
        %v199 = vunpack.c.l.b16 %v175
        %v200 = vunpack.c.h.b16 %v175
        %v201 = vunpack.c.l.b16 %v176
        %v202 = vunpack.c.h.b16 %v176
        %v203 = vunpack.c.l.b16 %v177
        %v204 = vunpack.c.h.b16 %v177
        %v205 = vunpack.c.l.b16 %v178
        %v206 = vunpack.c.h.b16 %v178
        %v207 = vunpack.c.l.b16 %v179
        %v208 = vunpack.c.h.b16 %v179
        %v209 = vpack.c.b16 %v195, %v193
        %v210 = vpack.c.b16 %v196, %v194
        %v211 = vpack.c.b16 %v199, %v197
        %v212 = vpack.c.b16 %v200, %v198
        %v213 = vpack.c.b16 %v203, %v201
        %v214 = vpack.c.b16 %v204, %v202
        %v215 = vpack.c.b16 %v207, %v205
        %v216 = vpack.c.b16 %v208, %v206
        %vm225 = vcmask 523264
        %v227 = vsel %vm225, %v184, 0
        %229 = vmatpush.bf16.msra.mxu0 0
        %230 = vmatpush.bf16.msra.mxu0 0
        %231 = vmatpush.bf16.msra.mxu0 0
        %232 = vmatpush.bf16.msra.mxu0 0
        %233 = vmatpush.bf16.msra.mxu0 %v215
        %234 = vmatpush.bf16.msra.mxu0 %v213
        %235 = vmatpush.bf16.msra.mxu0 %v211
        %236 = vmatpush.bf16.msra.mxu0 %v209
        %237 = vmatmul.bf16.gmra.mxu0 %v227
        %v238 = vpop.f32.mrf.mxu0
        %v239 = vadd.f32 0.0, %v238
        %v240 = vpop.f32.mrf.mxu0
        %v241 = vadd.f32 0.0, %v240
        %242 = vdwg.mxu0
        %243 = vmatpush.bf16.msra.mxu0 0
        %244 = vmatpush.bf16.msra.mxu0 0
        %245 = vmatpush.bf16.msra.mxu0 0
        %246 = vmatpush.bf16.msra.mxu0 0
        %247 = vmatpush.bf16.msra.mxu0 %v216
        %248 = vmatpush.bf16.msra.mxu0 %v214
        %249 = vmatpush.bf16.msra.mxu0 %v212
        %250 = vmatpush.bf16.msra.mxu0 %v210
        %251 = vmatmul.bf16.gmra.mxu0 %v227
        %v252 = vpop.f32.mrf.mxu0
        %v253 = vadd.f32 0.0, %v252
        %v254 = vpop.f32.mrf.mxu0
        %v255 = vadd.f32 0.0, %v254
        %256 = vdwg.mxu0
        %v257 = vpack.c.bf16 %v239, %v239
        %v258 = vpack.c.bf16 %v241, %v241
        %vm259 = vcmask 125952
        %260 = vst.msk [vmem:[%s157] sm:$0xf] %vm259, %v257
        %261 = vst.msk [vmem:[%s157 + $0x4] sm:$0xf] %vm259, %v258
        %264 = vrot.lane.b32.xlu0 %v257, 112
        %v265 = vpop.permute.xlu0 %264
        %266 = vrot.lane.b32.xlu0 %v258, 112
        %v267 = vpop.permute.xlu0 %266
        %s270 = scalar_lea.vmem %s157, 8 [#allocation2]
        %271 = vst.msk [vmem:[%s270] sm:$0xf] %vm259, %v265
        %272 = vst.msk [vmem:[%s270 + $0x4] sm:$0xf] %vm259, %v267
        %273 = vrot.lane.b32.xlu0 %v257, 96
        %v274 = vpop.permute.xlu0 %273
        %275 = vrot.lane.b32.xlu0 %v258, 96
        %v276 = vpop.permute.xlu0 %275
        %s279 = scalar_lea.vmem %s157, 16 [#allocation2]
        %280 = vst.msk [vmem:[%s279] sm:$0xf] %vm259, %v274
        %281 = vst.msk [vmem:[%s279 + $0x4] sm:$0xf] %vm259, %v276
        %282 = vrot.lane.b32.xlu0 %v257, 80
        %v283 = vpop.permute.xlu0 %282
        %284 = vrot.lane.b32.xlu0 %v258, 80
        %v285 = vpop.permute.xlu0 %284
        %s288 = scalar_lea.vmem %s157, 24 [#allocation2]
        %289 = vst.msk [vmem:[%s288] sm:$0xf] %vm259, %v283
        %290 = vst.msk [vmem:[%s288 + $0x4] sm:$0xf] %vm259, %v285
        %291 = vrot.lane.b32.xlu0 %v257, 64
        %v292 = vpop.permute.xlu0 %291
        %293 = vrot.lane.b32.xlu0 %v258, 64
        %v294 = vpop.permute.xlu0 %293
        %s297 = scalar_lea.vmem %s157, 32 [#allocation2]
        %298 = vst.msk [vmem:[%s297] sm:$0xf] %vm259, %v292
        %299 = vst.msk [vmem:[%s297 + $0x4] sm:$0xf] %vm259, %v294
        %300 = vrot.lane.b32.xlu0 %v257, 48
        %v301 = vpop.permute.xlu0 %300
        %302 = vrot.lane.b32.xlu0 %v258, 48
        %v303 = vpop.permute.xlu0 %302
        %s306 = scalar_lea.vmem %s157, 40 [#allocation2]
        %307 = vst.msk [vmem:[%s306] sm:$0xf] %vm259, %v301
        %308 = vst.msk [vmem:[%s306 + $0x4] sm:$0xf] %vm259, %v303
        %309 = vrot.lane.b32.xlu0 %v257, 32
        %v310 = vpop.permute.xlu0 %309
        %311 = vrot.lane.b32.xlu0 %v258, 32
        %v312 = vpop.permute.xlu0 %311
        %s315 = scalar_lea.vmem %s157, 48 [#allocation2]
        %316 = vst.msk [vmem:[%s315] sm:$0xf] %vm259, %v310
        %317 = vst.msk [vmem:[%s315 + $0x4] sm:$0xf] %vm259, %v312
        %318 = vrot.lane.b32.xlu0 %v257, 16
        %v319 = vpop.permute.xlu0 %318
        %320 = vrot.lane.b32.xlu0 %v258, 16
        %v321 = vpop.permute.xlu0 %320
        %s324 = scalar_lea.vmem %s157, 56 [#allocation2]
        %325 = vst.msk [vmem:[%s324] sm:$0xf] %vm259, %v319
        %326 = vst.msk [vmem:[%s324 + $0x4] sm:$0xf] %vm259, %v321
        %v327 = vpack.c.bf16 %v253, %v253
        %v328 = vpack.c.bf16 %v255, %v255
        %s329 = scalar_lea.vmem %s157, 64 [#allocation2]
        %330 = vst.msk [vmem:[%s329] sm:$0xf] %vm259, %v327
        %331 = vst.msk [vmem:[%s329 + $0x4] sm:$0xf] %vm259, %v328
        %334 = vrot.lane.b32.xlu0 %v327, 112
        %v335 = vpop.permute.xlu0 %334
        %336 = vrot.lane.b32.xlu0 %v328, 112
        %v337 = vpop.permute.xlu0 %336
        %s340 = scalar_lea.vmem %s157, 72 [#allocation2]
        %341 = vst.msk [vmem:[%s340] sm:$0xf] %vm259, %v335
        %342 = vst.msk [vmem:[%s340 + $0x4] sm:$0xf] %vm259, %v337
        %343 = vrot.lane.b32.xlu0 %v327, 96
        %v344 = vpop.permute.xlu0 %343
        %345 = vrot.lane.b32.xlu0 %v328, 96
        %v346 = vpop.permute.xlu0 %345
        %s349 = scalar_lea.vmem %s157, 80 [#allocation2]
        %350 = vst.msk [vmem:[%s349] sm:$0xf] %vm259, %v344
        %351 = vst.msk [vmem:[%s349 + $0x4] sm:$0xf] %vm259, %v346
        %352 = vrot.lane.b32.xlu0 %v327, 80
        %v353 = vpop.permute.xlu0 %352
        %354 = vrot.lane.b32.xlu0 %v328, 80
        %v355 = vpop.permute.xlu0 %354
        %s358 = scalar_lea.vmem %s157, 88 [#allocation2]
        %359 = vst.msk [vmem:[%s358] sm:$0xf] %vm259, %v353
        %360 = vst.msk [vmem:[%s358 + $0x4] sm:$0xf] %vm259, %v355
        %s361 = sand.u32 %s84, 1
        %s362 = sand.u32 %s84, 1
        %s363 = smul.addr %s362, 96
        %s364 = scalar_lea.vmem [#allocation2], %s363
        // Predicated region
        $region29: #{attention_forward.3} parent=27 // pred_check
          %p365 = pneg %p94
        $region30: #{attention_forward.3} parent=27 // pred_check_branch
          %367 = sbr.rel (%p365) target = $region32
        $region31: #{attention_forward.3} parent=27 // pred_region
          %s368 = smul.u32 2, %s18
          %s369 = smul.addr %s17, 8
          %s370 = sadd.s32 %s368, %s369
          %s371 = smul.addr %s370, 4
          %s372 = scalar_lea.vmem %s2, %s371
          // Predicated region
          $region33: #{attention_forward.3} parent=31 // pred_check
            _
          $region34: #{attention_forward.3} parent=31 // pred_check_branch
            %374 = sbr.rel (0) target = $region36
          $region35: #{attention_forward.3} parent=31 // pred_region
            // Predicated region
            $region37: #{attention_forward.3} parent=35 // pred_check
              _
            $region38: #{attention_forward.3} parent=35 // pred_check_branch
              %376 = sbr.rel target = $region40
            $region39: #{attention_forward.3} parent=35 // pred_region
              // Predicated region
              $region52: #{attention_forward.3} parent=39 // pred_check
                _
              $region53: #{attention_forward.3} parent=39 // pred_check_branch
                %438 = sbr.rel (0) target = $region55
              $region54: #{attention_forward.3} parent=39 // pred_region
                loop: start=0, step=1, limit=1
                $region56: #{attention_forward.3} parent=54 // loop_pre_header
                  _
                $region57: #{attention_forward.3} parent=54 // loop_header
                  %s440 = sphi 0, %s444
                  %p441 = scmp.ge.s32.totalorder %s440, 1
                  %s445 = sphi %s364, %s364
                  %s446 = sphi %s372, %s372
                $region58: #{attention_forward.3} parent=54 // loop_header_branch
                  %443 = sbr.rel (%p441) target = $region62
                $region59: #{attention_forward.3} parent=54 // loop_body
                  _
                $region60: #{attention_forward.3} parent=54 // loop_footer
                  %s444 = sadd.s32 1, %s440
                $region61: #{attention_forward.3} parent=54 // loop_footer_branch
                  %439 = sbr.rel target = $region57
                $region62: #{attention_forward.3} parent=54 // loop_exit
                  _
                %s448 = ssub.s32 16, 1
                loop: start=0, step=1, limit=1
                $region63: #{attention_forward.3} parent=54 // loop_pre_header
                  _
                $region64: #{attention_forward.3} parent=54 // loop_header
                  %s450 = sphi 0, %s454
                  %p451 = scmp.ge.s32.totalorder %s450, 1
                  %s455 = sphi %s364, %s364
                  %s456 = sphi %s372, %s372
                $region65: #{attention_forward.3} parent=54 // loop_header_branch
                  %453 = sbr.rel (%p451) target = $region69
                $region66: #{attention_forward.3} parent=54 // loop_body
                  %v457 = vld [vmem:[%s455] sm:%s448]
                  %458 = vst [vmem:[%s456] sm:%s448] %v457
                  %v459 = vld [vmem:[%s455 + $0x4] sm:%s448]
                  %460 = vst [vmem:[%s456 + $0x4] sm:%s448] %v459
                  %v461 = vld [vmem:[%s455 + $0x8] sm:%s448]
                  %462 = vst [vmem:[%s456 + $0x8] sm:%s448] %v461
                  %v463 = vld [vmem:[%s455 + $0xc] sm:%s448]
                  %464 = vst [vmem:[%s456 + $0xc] sm:%s448] %v463
                  %v465 = vld [vmem:[%s455 + $0x10] sm:%s448]
                  %466 = vst [vmem:[%s456 + $0x10] sm:%s448] %v465
                  %v467 = vld [vmem:[%s455 + $0x14] sm:%s448]
                  %468 = vst [vmem:[%s456 + $0x14] sm:%s448] %v467
                  %v469 = vld [vmem:[%s455 + $0x18] sm:%s448]
                  %470 = vst [vmem:[%s456 + $0x18] sm:%s448] %v469
                  %v471 = vld [vmem:[%s455 + $0x1c] sm:%s448]
                  %472 = vst [vmem:[%s456 + $0x1c] sm:%s448] %v471
                  %v473 = vld [vmem:[%s455 + $0x20] sm:%s448]
                  %474 = vst [vmem:[%s456 + $0x40] sm:%s448] %v473
                  %v475 = vld [vmem:[%s455 + $0x24] sm:%s448]
                  %476 = vst [vmem:[%s456 + $0x44] sm:%s448] %v475
                  %v477 = vld [vmem:[%s455 + $0x28] sm:%s448]
                  %478 = vst [vmem:[%s456 + $0x48] sm:%s448] %v477
                  %v479 = vld [vmem:[%s455 + $0x2c] sm:%s448]
                  %480 = vst [vmem:[%s456 + $0x4c] sm:%s448] %v479
                  %v481 = vld [vmem:[%s455 + $0x30] sm:%s448]
                  %482 = vst [vmem:[%s456 + $0x50] sm:%s448] %v481
                  %v483 = vld [vmem:[%s455 + $0x34] sm:%s448]
                  %484 = vst [vmem:[%s456 + $0x54] sm:%s448] %v483
                  %v485 = vld [vmem:[%s455 + $0x38] sm:%s448]
                  %486 = vst [vmem:[%s456 + $0x58] sm:%s448] %v485
                  %v487 = vld [vmem:[%s455 + $0x3c] sm:%s448]
                  %488 = vst [vmem:[%s456 + $0x5c] sm:%s448] %v487
                  %v489 = vld [vmem:[%s455 + $0x40] sm:%s448]
                  %490 = vst [vmem:[%s456 + $0x80] sm:%s448] %v489
                  %v491 = vld [vmem:[%s455 + $0x44] sm:%s448]
                  %492 = vst [vmem:[%s456 + $0x84] sm:%s448] %v491
                  %v493 = vld [vmem:[%s455 + $0x48] sm:%s448]
                  %494 = vst [vmem:[%s456 + $0x88] sm:%s448] %v493
                  %v495 = vld [vmem:[%s455 + $0x4c] sm:%s448]
                  %496 = vst [vmem:[%s456 + $0x8c] sm:%s448] %v495
                  %v497 = vld [vmem:[%s455 + $0x50] sm:%s448]
                  %498 = vst [vmem:[%s456 + $0x90] sm:%s448] %v497
                  %v499 = vld [vmem:[%s455 + $0x54] sm:%s448]
                  %500 = vst [vmem:[%s456 + $0x94] sm:%s448] %v499
                  %v501 = vld [vmem:[%s455 + $0x58] sm:%s448]
                  %502 = vst [vmem:[%s456 + $0x98] sm:%s448] %v501
                  %v503 = vld [vmem:[%s455 + $0x5c] sm:%s448]
                  %504 = vst [vmem:[%s456 + $0x9c] sm:%s448] %v503
                $region67: #{attention_forward.3} parent=54 // loop_footer
                  %s454 = sadd.s32 1, %s450
                $region68: #{attention_forward.3} parent=54 // loop_footer_branch
                  %449 = sbr.rel target = $region64
                $region69: #{attention_forward.3} parent=54 // loop_exit
                  _
              $region55: #{attention_forward.3} parent=39 // pred_fallthru
                _
            $region40: #{attention_forward.3} parent=35 // pred_fallthru
              _
            // Predicated region
            $region41: #{attention_forward.3} parent=35 // pred_check
              _
            $region42: #{attention_forward.3} parent=35 // pred_check_branch
              %378 = sbr.rel (0) target = $region44
            $region43: #{attention_forward.3} parent=35 // pred_region
              %s380 = ssub.s32 16, 1
              loop: start=0, step=1, limit=1
              $region45: #{attention_forward.3} parent=43 // loop_pre_header
                _
              $region46: #{attention_forward.3} parent=43 // loop_header
                %s382 = sphi 0, %s386
                %p383 = scmp.ge.s32.totalorder %s382, 1
                %s387 = sphi %s364, %s364
                %s388 = sphi %s372, %s372
              $region47: #{attention_forward.3} parent=43 // loop_header_branch
                %385 = sbr.rel (%p383) target = $region51
              $region48: #{attention_forward.3} parent=43 // loop_body
                %v389 = vld [vmem:[%s387] sm:%s380]
                %390 = vst [vmem:[%s388] sm:%s380] %v389
                %v391 = vld [vmem:[%s387 + $0x4] sm:%s380]
                %392 = vst [vmem:[%s388 + $0x4] sm:%s380] %v391
                %v393 = vld [vmem:[%s387 + $0x8] sm:%s380]
                %394 = vst [vmem:[%s388 + $0x8] sm:%s380] %v393
                %v395 = vld [vmem:[%s387 + $0xc] sm:%s380]
                %396 = vst [vmem:[%s388 + $0xc] sm:%s380] %v395
                %v397 = vld [vmem:[%s387 + $0x10] sm:%s380]
                %398 = vst [vmem:[%s388 + $0x10] sm:%s380] %v397
                %v399 = vld [vmem:[%s387 + $0x14] sm:%s380]
                %400 = vst [vmem:[%s388 + $0x14] sm:%s380] %v399
                %v401 = vld [vmem:[%s387 + $0x18] sm:%s380]
                %402 = vst [vmem:[%s388 + $0x18] sm:%s380] %v401
                %v403 = vld [vmem:[%s387 + $0x1c] sm:%s380]
                %404 = vst [vmem:[%s388 + $0x1c] sm:%s380] %v403
                %v405 = vld [vmem:[%s387 + $0x20] sm:%s380]
                %406 = vst [vmem:[%s388 + $0x40] sm:%s380] %v405
                %v407 = vld [vmem:[%s387 + $0x24] sm:%s380]
                %408 = vst [vmem:[%s388 + $0x44] sm:%s380] %v407
                %v409 = vld [vmem:[%s387 + $0x28] sm:%s380]
                %410 = vst [vmem:[%s388 + $0x48] sm:%s380] %v409
                %v411 = vld [vmem:[%s387 + $0x2c] sm:%s380]
                %412 = vst [vmem:[%s388 + $0x4c] sm:%s380] %v411
                %v413 = vld [vmem:[%s387 + $0x30] sm:%s380]
                %414 = vst [vmem:[%s388 + $0x50] sm:%s380] %v413
                %v415 = vld [vmem:[%s387 + $0x34] sm:%s380]
                %416 = vst [vmem:[%s388 + $0x54] sm:%s380] %v415
                %v417 = vld [vmem:[%s387 + $0x38] sm:%s380]
                %418 = vst [vmem:[%s388 + $0x58] sm:%s380] %v417
                %v419 = vld [vmem:[%s387 + $0x3c] sm:%s380]
                %420 = vst [vmem:[%s388 + $0x5c] sm:%s380] %v419
                %v421 = vld [vmem:[%s387 + $0x40] sm:%s380]
                %422 = vst [vmem:[%s388 + $0x80] sm:%s380] %v421
                %v423 = vld [vmem:[%s387 + $0x44] sm:%s380]
                %424 = vst [vmem:[%s388 + $0x84] sm:%s380] %v423
                %v425 = vld [vmem:[%s387 + $0x48] sm:%s380]
                %426 = vst [vmem:[%s388 + $0x88] sm:%s380] %v425
                %v427 = vld [vmem:[%s387 + $0x4c] sm:%s380]
                %428 = vst [vmem:[%s388 + $0x8c] sm:%s380] %v427
                %v429 = vld [vmem:[%s387 + $0x50] sm:%s380]
                %430 = vst [vmem:[%s388 + $0x90] sm:%s380] %v429
                %v431 = vld [vmem:[%s387 + $0x54] sm:%s380]
                %432 = vst [vmem:[%s388 + $0x94] sm:%s380] %v431
                %v433 = vld [vmem:[%s387 + $0x58] sm:%s380]
                %434 = vst [vmem:[%s388 + $0x98] sm:%s380] %v433
                %v435 = vld [vmem:[%s387 + $0x5c] sm:%s380]
                %436 = vst [vmem:[%s388 + $0x9c] sm:%s380] %v435
              $region49: #{attention_forward.3} parent=43 // loop_footer
                %s386 = sadd.s32 1, %s382
              $region50: #{attention_forward.3} parent=43 // loop_footer_branch
                %381 = sbr.rel target = $region46
              $region51: #{attention_forward.3} parent=43 // loop_exit
                _
            $region44: #{attention_forward.3} parent=35 // pred_fallthru
              _
          $region36: #{attention_forward.3} parent=31 // pred_fallthru
            _
          %505 = vnop
        $region32: #{attention_forward.3} parent=27 // pred_fallthru
          _
      $region28: #{attention_forward.3} parent=5 // pred_fallthru
        _
      %p506 = scmp.le.s32.totalorder 2, %s8
      // Predicated region
      $region70: #{attention_forward.3} parent=5 // pred_check
        %p507 = pneg %p506
      $region71: #{attention_forward.3} parent=5 // pred_check_branch
        %509 = sbr.rel (%p507) target = $region73
      $region72: #{attention_forward.3} parent=5 // pred_region
        %s510 = ssub.s32 %s8, 2
        // Predicated region
        $region74: #{attention_forward.3} parent=72 // pred_check
          %p511 = pneg %p100
        $region75: #{attention_forward.3} parent=72 // pred_check_branch
          %513 = sbr.rel (%p511) target = $region77
        $region76: #{attention_forward.3} parent=72 // pred_region
          %s514 = sand.u32 %s85, 1
          %s515 = sand.u32 %s85, 1
          %s516 = smul.addr %s515, 96
          %s517 = scalar_lea.vmem [#allocation2], %s516
        $region77: #{attention_forward.3} parent=72 // pred_fallthru
          _
      $region73: #{attention_forward.3} parent=5 // pred_fallthru
        _
    $region6: #{attention_forward.3} parent=1 // loop_footer
      %s12 = sadd.s32 1, %s8
    $region7: #{attention_forward.3} parent=1 // loop_footer_branch
      %7 = sbr.rel target = $region3
    $region8: #{attention_forward.3} parent=1 // loop_exit
      _

// kernel: attention_forward.4
$region0: #{attention_forward.4}
  #allocation0 [shape = 'u32[]', space=smem, size = 0x4, offset = 0x4, fixed_abs, tag = 'smem constant byte address 0x4 - core index']
  #allocation1 [shape = 'u32[72,128]{1,0:T(1,128)}', space=vmem, size = 0x9000, scoped, tag = 'internal scratch']
  #allocation2 [shape = 'f32[4,16,1]{2,1,0:T(8,128)}', space=vmem, size = 0x8000, scoped, tag = 'scratch operand']
  #allocation3 [shape = 'f32[4,16,1]{2,1,0:T(8,128)}', space=vmem, size = 0x8000, scoped, tag = 'scratch operand']
  #allocation4 [shape = 'f32[4,16,16]{2,1,0:T(8,128)}', space=vmem, size = 0x8000, scoped, tag = 'scratch operand']
  %s0 = inlined_call_operand.vmem [shape: bf16[3,2,4,16,16], index: 0, kind: input, shape index: {}, may-alias: {0,1,2}]
  %s1 = inlined_call_operand.vmem [shape: bf16[3,2,4,16,16], index: 1, kind: input, shape index: {}, may-alias: {0,1,2}]
  %s2 = inlined_call_operand.vmem [shape: bf16[3,2,4,16,16], index: 2, kind: input, shape index: {}, may-alias: {0,1,2}]
  %s3 = inlined_call_operand.vmem [shape: bf16[2,16,64], index: 3, kind: output, shape index: {}]
  %s4 = sld [smem:[#allocation0]]
  $region53: #{attention_forward.4} parent=0
    _
  %s6 = ssub.s32 1, %s4
  %s7 = scalar_select 0, %s6, %s4
  loop: start=0, step=1, limit=4
  $region2: #{attention_forward.4} parent=0 // loop_pre_header
    _
  $region3: #{attention_forward.4} parent=0 // loop_header
    %s9 = sphi 0, %s13
    %p10 = scmp.ge.s32.totalorder %s9, 4
    %s16 = sphi 0, %s42
    %s17 = sphi 0, %s38
    %s18 = sphi 0, %s34
    %s19 = sphi 0, %s30
    %s20 = sphi 0, %s16
    %s21 = sphi 0, %s17
    %s22 = sphi 0, %s18
    %s23 = sphi 0, %s19
    %s24 = sphi 0, %s20
    %s25 = sphi 0, %s21
    %s26 = sphi 0, %s22
    %s27 = sphi 0, %s23
    %s49 = sphi 0, %s51
    %s52 = sphi 0, %s49
    %s53 = sphi 0, %s52
    %s69 = sphi 0, %s53
    %s79 = sphi 0, %s81
    %s82 = sphi 0, %s79
    %s83 = sphi 0, %s82
    %s99 = sphi 0, %s83
    %s109 = sphi 0, %s111
    %s112 = sphi 0, %s109
    %s113 = sphi 0, %s112
    %s129 = sphi 0, %s113
    %s139 = sphi 0, %s141
    %s142 = sphi 0, %s139
    %s143 = sphi 0, %s142
    %s159 = sphi 0, %s143
  $region4: #{attention_forward.4} parent=0 // loop_header_branch
    %12 = sbr.rel (%p10) target = $region8
  $region5: #{attention_forward.4} parent=0 // loop_body
    %s14 = ssub.s32 %s9, 1
    %s15 = ssub.s32 %s9, 2
    %s28 = sadd.s32 1, %s19
    %p29 = scmp.ge.s32.totalorder %s28, 1
    %s30 = scalar_select %p29, 0, %s28
    %s31 = sadd.s32 1, %s18
    %s32 = scalar_select %p29, %s31, %s18
    %p33 = scmp.ge.s32.totalorder %s32, 1
    %s34 = scalar_select %p33, 0, %s32
    %s35 = sadd.s32 1, %s17
    %s36 = scalar_select %p33, %s35, %s17
    %p37 = scmp.ge.s32.totalorder %s36, 1
    %s38 = scalar_select %p37, 0, %s36
    %s39 = sadd.s32 1, %s16
    %s40 = scalar_select %p37, %s39, %s16
    %p41 = scmp.ge.s32.totalorder %s40, 2
    %s42 = scalar_select %p41, 0, %s40
    %s43 = ssub.s32 %s16, %s42
    %s44 = ssub.s32 %s17, %s38
    %s45 = sor.u32 %s43, %s44
    %s46 = ssub.s32 %s18, %s34
    %s47 = sor.u32 %s45, %s46
    %p48 = scmp.eq.s32.totalorder %s47, 0
    %s50 = sadd.s32 %s49, 1
    %s51 = scalar_select %p48, %s49, %s50
    %p54 = pneg %p48
    %p55 = scmp.eq.s32.totalorder %s9, 1
    %p56 = por %p54, %p55
    %p57 = scmp.ne.s32.totalorder %s49, %s52
    %p58 = scmp.eq.s32.totalorder %s9, 0
    %p59 = por %p57, %p58
    %p60 = scmp.ne.s32.totalorder %s49, %s52
    %p61 = scmp.eq.s32.totalorder %s14, 1
    %p62 = por %p60, %p61
    %p63 = scmp.ne.s32.totalorder %s52, %s53
    %p64 = scmp.eq.s32.totalorder %s14, 0
    %p65 = por %p63, %p64
    %p66 = scmp.ne.s32.totalorder %s52, %s53
    %p67 = scmp.eq.s32.totalorder %s15, 1
    %p68 = por %p66, %p67
    %p70 = scmp.ne.s32.totalorder %s53, %s69
    %p71 = scmp.eq.s32.totalorder %s15, 0
    %p72 = por %p70, %p71
    %s73 = ssub.s32 %s16, %s42
    %s74 = ssub.s32 %s17, %s38
    %s75 = sor.u32 %s73, %s74
    %s76 = ssub.s32 %s19, %s30
    %s77 = sor.u32 %s75, %s76
    %p78 = scmp.eq.s32.totalorder %s77, 0
    %s80 = sadd.s32 %s79, 1
    %s81 = scalar_select %p78, %s79, %s80
    %p84 = pneg %p78
    %p85 = scmp.eq.s32.totalorder %s9, 1
    %p86 = por %p84, %p85
    %p87 = scmp.ne.s32.totalorder %s79, %s82
    %p88 = scmp.eq.s32.totalorder %s9, 0
    %p89 = por %p87, %p88
    %p90 = scmp.ne.s32.totalorder %s79, %s82
    %p91 = scmp.eq.s32.totalorder %s14, 1
    %p92 = por %p90, %p91
    %p93 = scmp.ne.s32.totalorder %s82, %s83
    %p94 = scmp.eq.s32.totalorder %s14, 0
    %p95 = por %p93, %p94
    %p96 = scmp.ne.s32.totalorder %s82, %s83
    %p97 = scmp.eq.s32.totalorder %s15, 1
    %p98 = por %p96, %p97
    %p100 = scmp.ne.s32.totalorder %s83, %s99
    %p101 = scmp.eq.s32.totalorder %s15, 0
    %p102 = por %p100, %p101
    %s103 = ssub.s32 %s16, %s42
    %s104 = ssub.s32 %s17, %s38
    %s105 = sor.u32 %s103, %s104
    %s106 = ssub.s32 %s19, %s30
    %s107 = sor.u32 %s105, %s106
    %p108 = scmp.eq.s32.totalorder %s107, 0
    %s110 = sadd.s32 %s109, 1
    %s111 = scalar_select %p108, %s109, %s110
    %p114 = pneg %p108
    %p115 = scmp.eq.s32.totalorder %s9, 1
    %p116 = por %p114, %p115
    %p117 = scmp.ne.s32.totalorder %s109, %s112
    %p118 = scmp.eq.s32.totalorder %s9, 0
    %p119 = por %p117, %p118
    %p120 = scmp.ne.s32.totalorder %s109, %s112
    %p121 = scmp.eq.s32.totalorder %s14, 1
    %p122 = por %p120, %p121
    %p123 = scmp.ne.s32.totalorder %s112, %s113
    %p124 = scmp.eq.s32.totalorder %s14, 0
    %p125 = por %p123, %p124
    %p126 = scmp.ne.s32.totalorder %s112, %s113
    %p127 = scmp.eq.s32.totalorder %s15, 1
    %p128 = por %p126, %p127
    %p130 = scmp.ne.s32.totalorder %s113, %s129
    %p131 = scmp.eq.s32.totalorder %s15, 0
    %p132 = por %p130, %p131
    %s133 = ssub.s32 %s16, %s42
    %s134 = ssub.s32 %s18, %s34
    %s135 = sor.u32 %s133, %s134
    %s136 = ssub.s32 %s17, %s38
    %s137 = sor.u32 %s135, %s136
    %p138 = scmp.eq.s32.totalorder %s137, 0
    %s140 = sadd.s32 %s139, 1
    %s141 = scalar_select %p138, %s139, %s140
    %p144 = pneg %p138
    %p145 = scmp.eq.s32.totalorder %s9, 1
    %p146 = por %p144, %p145
    %p147 = scmp.ne.s32.totalorder %s139, %s142
    %p148 = scmp.eq.s32.totalorder %s9, 0
    %p149 = por %p147, %p148
    %p150 = scmp.ne.s32.totalorder %s139, %s142
    %p151 = scmp.eq.s32.totalorder %s14, 1
    %p152 = por %p150, %p151
    %p153 = scmp.ne.s32.totalorder %s142, %s143
    %p154 = scmp.eq.s32.totalorder %s14, 0
    %p155 = por %p153, %p154
    %p156 = scmp.ne.s32.totalorder %s142, %s143
    %p157 = scmp.eq.s32.totalorder %s15, 1
    %p158 = por %p156, %p157
    %p160 = scmp.ne.s32.totalorder %s143, %s159
    %p161 = scmp.eq.s32.totalorder %s15, 0
    %p162 = por %p160, %p161
    %p163 = scmp.le.s32.totalorder 1, %s9
    %p164 = scmp.lt.s32.totalorder %s9, 3
    %p165 = pnand %p163, %p164
    %p166 = pneg %p165
    // Predicated region
    $region9: #{attention_forward.4} parent=5 // pred_check
      _
    $region10: #{attention_forward.4} parent=5 // pred_check_branch
      %168 = sbr.rel (%p165) target = $region12
    $region11: #{attention_forward.4} parent=5 // pred_region
      %s169 = ssub.s32 %s9, 1
    $region12: #{attention_forward.4} parent=5 // pred_fallthru
      _
    %p170 = scmp.lt.s32.totalorder %s9, 2
    // Predicated region
    $region13: #{attention_forward.4} parent=5 // pred_check
      %p171 = pneg %p170
    $region14: #{attention_forward.4} parent=5 // pred_check_branch
      %173 = sbr.rel (%p171) target = $region16
    $region15: #{attention_forward.4} parent=5 // pred_region
      // Predicated region
      $region17: #{attention_forward.4} parent=15 // pred_check
        %p174 = pneg %p59
      $region18: #{attention_forward.4} parent=15 // pred_check_branch
        %176 = sbr.rel (%p174) target = $region20
      $region19: #{attention_forward.4} parent=15 // pred_region
        %s177 = smul.u32 4, %s17
        %s178 = smul.u32 2, %s18
        %p179 = scmp.lt.s32.totalorder %s16, 1
        %s180 = scalar_select %p179, %s16, 1
        %p181 = scmp.lt.s32.totalorder %s177, 3
        %s182 = scalar_select %p181, %s177, 3
        %p183 = scmp.lt.s32.totalorder %s178, 1
        %s184 = scalar_select %p183, %s178, 1
        %s185 = smul.addr %s182, 2
        %s186 = sadd.s32 %s184, %s185
        %s187 = smul.addr %s180, 8
        %s188 = sadd.s32 %s186, %s187
        %s189 = smul.addr %s188, 4
        %s190 = scalar_lea.vmem %s0, %s189
        %s191 = smul.u32 4, %s17
        %s192 = smul.u32 2, %s18
      $region20: #{attention_forward.4} parent=15 // pred_fallthru
        _
      // Predicated region
      $region21: #{attention_forward.4} parent=15 // pred_check
        %p193 = pneg %p89
      $region22: #{attention_forward.4} parent=15 // pred_check_branch
        %195 = sbr.rel (%p193) target = $region24
      $region23: #{attention_forward.4} parent=15 // pred_region
        %s196 = smul.u32 4, %s17
        %s197 = smul.u32 2, %s19
        %p198 = scmp.lt.s32.totalorder %s16, 1
        %s199 = scalar_select %p198, %s16, 1
        %p200 = scmp.lt.s32.totalorder %s196, 3
        %s201 = scalar_select %p200, %s196, 3
        %p202 = scmp.lt.s32.totalorder %s197, 1
        %s203 = scalar_select %p202, %s197, 1
        %s204 = smul.addr %s201, 2
        %s205 = sadd.s32 %s203, %s204
        %s206 = smul.addr %s199, 8
        %s207 = sadd.s32 %s205, %s206
        %s208 = sadd.s32 %s207, 16
        %s209 = smul.addr %s208, 4
        %s210 = scalar_lea.vmem %s1, %s209
        %s211 = smul.u32 4, %s17
        %s212 = smul.u32 2, %s19
      $region24: #{attention_forward.4} parent=15 // pred_fallthru
        _
      // Predicated region
      $region25: #{attention_forward.4} parent=15 // pred_check
        %p213 = pneg %p119
      $region26: #{attention_forward.4} parent=15 // pred_check_branch
        %215 = sbr.rel (%p213) target = $region28
      $region27: #{attention_forward.4} parent=15 // pred_region
        %s216 = smul.u32 4, %s17
        %s217 = smul.u32 2, %s19
        %p218 = scmp.lt.s32.totalorder %s16, 1
        %s219 = scalar_select %p218, %s16, 1
        %p220 = scmp.lt.s32.totalorder %s216, 3
        %s221 = scalar_select %p220, %s216, 3
        %p222 = scmp.lt.s32.totalorder %s217, 1
        %s223 = scalar_select %p222, %s217, 1
        %s224 = smul.addr %s221, 2
        %s225 = sadd.s32 %s223, %s224
        %s226 = smul.addr %s219, 8
        %s227 = sadd.s32 %s225, %s226
        %s228 = sadd.s32 %s227, 32
        %s229 = smul.addr %s228, 4
        %s230 = scalar_lea.vmem %s2, %s229
        %s231 = smul.u32 4, %s17
        %s232 = smul.u32 2, %s19
      $region28: #{attention_forward.4} parent=15 // pred_fallthru
        _
    $region16: #{attention_forward.4} parent=5 // pred_fallthru
      _
    %p233 = scmp.le.s32.totalorder 1, %s9
    %p234 = scmp.lt.s32.totalorder %s9, 3
    %p235 = pnand %p233, %p234
    %p236 = pneg %p235
    // Predicated region
    $region29: #{attention_forward.4} parent=5 // pred_check
      _
    $region30: #{attention_forward.4} parent=5 // pred_check_branch
      %238 = sbr.rel (%p235) target = $region32
    $region31: #{attention_forward.4} parent=5 // pred_region
      %s239 = ssub.s32 %s9, 1
      %s240 = smul.u32 4, %s21
      %s241 = smul.u32 2, %s22
      %p242 = scmp.lt.s32.totalorder %s20, 1
      %s243 = scalar_select %p242, %s20, 1
      %p244 = scmp.lt.s32.totalorder %s240, 3
      %s245 = scalar_select %p244, %s240, 3
      %p246 = scmp.lt.s32.totalorder %s241, 1
      %s247 = scalar_select %p246, %s241, 1
      %s248 = smul.addr %s245, 2
      %s249 = sadd.s32 %s247, %s248
      %s250 = smul.addr %s243, 8
      %s251 = sadd.s32 %s249, %s250
      %s252 = smul.addr %s251, 4
      %s253 = scalar_lea.vmem %s0, %s252
      %p254 = pneg %p65
      %p255 = pneg %p62
      %s256 = smul.u32 4, %s21
      %s257 = smul.u32 2, %s23
      %p258 = scmp.lt.s32.totalorder %s20, 1
      %s259 = scalar_select %p258, %s20, 1
      %p260 = scmp.lt.s32.totalorder %s256, 3
      %s261 = scalar_select %p260, %s256, 3
      %p262 = scmp.lt.s32.totalorder %s257, 1
      %s263 = scalar_select %p262, %s257, 1
      %s264 = smul.addr %s261, 2
      %s265 = sadd.s32 %s263, %s264
      %s266 = smul.addr %s259, 8
      %s267 = sadd.s32 %s265, %s266
      %s268 = sadd.s32 %s267, 16
      %s269 = smul.addr %s268, 4
      %s270 = scalar_lea.vmem %s1, %s269
      %p271 = pneg %p95
      %p272 = pneg %p92
      %s273 = smul.u32 4, %s21
      %s274 = smul.u32 2, %s23
      %p275 = scmp.lt.s32.totalorder %s20, 1
      %s276 = scalar_select %p275, %s20, 1
      %p277 = scmp.lt.s32.totalorder %s273, 3
      %s278 = scalar_select %p277, %s273, 3
      %p279 = scmp.lt.s32.totalorder %s274, 1
      %s280 = scalar_select %p279, %s274, 1
      %s281 = smul.addr %s278, 2
      %s282 = sadd.s32 %s280, %s281
      %s283 = smul.addr %s276, 8
      %s284 = sadd.s32 %s282, %s283
      %s285 = sadd.s32 %s284, 32
      %s286 = smul.addr %s285, 4
      %s287 = scalar_lea.vmem %s2, %s286
      %p288 = pneg %p125
      %p289 = pneg %p122
      %p290 = pneg %p155
      %p291 = pneg %p152
      %s292 = smul.u32 2, %s22
      %p293 = scmp.lt.s32.totalorder %s20, 1
      %s294 = scalar_select %p293, %s20, 1
      %p295 = scmp.lt.s32.totalorder %s292, 1
      %s296 = scalar_select %p295, %s292, 1
      %p297 = scmp.lt.s32.totalorder %s21, 0
      %s298 = scalar_select %p297, %s21, 0
      %s299 = sadd.s32 %s298, %s296
      %s300 = smul.addr %s294, 2
      %s301 = sadd.s32 %s299, %s300
      %s302 = smul.addr %s301, 4
      %s303 = scalar_lea.vmem %s3, %s302
      %s304 = smul.u32 4, %s21
      %s305 = smul.u32 2, %s22
      %p306 = scmp.lt.s32.totalorder %s20, 1
      %s307 = scalar_select %p306, %s20, 1
      %p308 = scmp.lt.s32.totalorder %s304, 3
      %s309 = scalar_select %p308, %s304, 3
      %p310 = scmp.lt.s32.totalorder %s305, 1
      %s311 = scalar_select %p310, %s305, 1
      %s312 = smul.addr %s309, 2
      %s313 = sadd.s32 %s311, %s312
      %s314 = smul.addr %s307, 8
      %s315 = sadd.s32 %s313, %s314
      %s316 = smul.addr %s315, 4
      %s317 = scalar_lea.vmem %s0, %s316
      %s318 = smul.u32 4, %s21
      %s319 = smul.u32 2, %s22
      %s320 = smul.u32 4, %s21
      %s321 = smul.u32 2, %s23
      %p322 = scmp.lt.s32.totalorder %s20, 1
      %s323 = scalar_select %p322, %s20, 1
      %p324 = scmp.lt.s32.totalorder %s320, 3
      %s325 = scalar_select %p324, %s320, 3
      %p326 = scmp.lt.s32.totalorder %s321, 1
      %s327 = scalar_select %p326, %s321, 1
      %s328 = smul.addr %s325, 2
      %s329 = sadd.s32 %s327, %s328
      %s330 = smul.addr %s323, 8
      %s331 = sadd.s32 %s329, %s330
      %s332 = sadd.s32 %s331, 16
      %s333 = smul.addr %s332, 4
      %s334 = scalar_lea.vmem %s1, %s333
      %s335 = smul.u32 4, %s21
      %s336 = smul.u32 2, %s23
      %s337 = smul.u32 4, %s21
      %s338 = smul.u32 2, %s23
      %p339 = scmp.lt.s32.totalorder %s20, 1
      %s340 = scalar_select %p339, %s20, 1
      %p341 = scmp.lt.s32.totalorder %s337, 3
      %s342 = scalar_select %p341, %s337, 3
      %p343 = scmp.lt.s32.totalorder %s338, 1
      %s344 = scalar_select %p343, %s338, 1
      %s345 = smul.addr %s342, 2
      %s346 = sadd.s32 %s344, %s345
      %s347 = smul.addr %s340, 8
      %s348 = sadd.s32 %s346, %s347
      %s349 = sadd.s32 %s348, 32
      %s350 = smul.addr %s349, 4
      %s351 = scalar_lea.vmem %s2, %s350
      %s352 = smul.u32 4, %s21
      %s353 = smul.u32 2, %s23
      %s354 = smul.u32 2, %s22
      %p355 = scmp.lt.s32.totalorder %s20, 1
      %s356 = scalar_select %p355, %s20, 1
      %p357 = scmp.lt.s32.totalorder %s354, 1
      %s358 = scalar_select %p357, %s354, 1
      %p359 = scmp.lt.s32.totalorder %s21, 0
      %s360 = scalar_select %p359, %s21, 0
      %s361 = sadd.s32 %s360, %s358
      %s362 = smul.addr %s356, 2
      %s363 = sadd.s32 %s361, %s362
      %s364 = smul.addr %s363, 4
      %s365 = scalar_lea.vmem %s3, %s364
      %s366 = smul.u32 2, %s22
      %p368 = scmp.eq.s32.totalorder %s23, 0
      // Predicated region
      $region33: #{attention_forward.4} parent=31 // pred_check
        %p369 = pneg %p368
      $region34: #{attention_forward.4} parent=31 // pred_check_branch
        %371 = sbr.rel (%p369) target = $region36
      $region35: #{attention_forward.4} parent=31 // pred_region
        %vm372 = vcmask 7168
        %373 = vst.msk [vmem:[#allocation2] sm:$0xff] %vm372, -1e+30
        %374 = vst.msk [vmem:[#allocation2 + $0x8] sm:$0xff] %vm372, -1e+30
        %375 = vst.msk [vmem:[#allocation2 + $0x10] sm:$0xff] %vm372, -1e+30
        %376 = vst.msk [vmem:[#allocation2 + $0x18] sm:$0xff] %vm372, -1e+30
        %377 = vst.msk [vmem:[#allocation2 + $0x20] sm:$0xff] %vm372, -1e+30
        %378 = vst.msk [vmem:[#allocation2 + $0x28] sm:$0xff] %vm372, -1e+30
        %379 = vst.msk [vmem:[#allocation2 + $0x30] sm:$0xff] %vm372, -1e+30
        %380 = vst.msk [vmem:[#allocation2 + $0x38] sm:$0xff] %vm372, -1e+30
        %381 = vst.msk [vmem:[#allocation3] sm:$0xff] %vm372, 0.0
        %382 = vst.msk [vmem:[#allocation3 + $0x8] sm:$0xff] %vm372, 0.0
        %383 = vst.msk [vmem:[#allocation3 + $0x10] sm:$0xff] %vm372, 0.0
        %384 = vst.msk [vmem:[#allocation3 + $0x18] sm:$0xff] %vm372, 0.0
        %385 = vst.msk [vmem:[#allocation3 + $0x20] sm:$0xff] %vm372, 0.0
        %386 = vst.msk [vmem:[#allocation3 + $0x28] sm:$0xff] %vm372, 0.0
        %387 = vst.msk [vmem:[#allocation3 + $0x30] sm:$0xff] %vm372, 0.0
        %388 = vst.msk [vmem:[#allocation3 + $0x38] sm:$0xff] %vm372, 0.0
        %vm389 = vcmask 130048
        %390 = vst.msk [vmem:[#allocation4] sm:$0xff] %vm389, 0.0
        %391 = vst.msk [vmem:[#allocation4 + $0x8] sm:$0xff] %vm389, 0.0
        %392 = vst.msk [vmem:[#allocation4 + $0x10] sm:$0xff] %vm389, 0.0
        %393 = vst.msk [vmem:[#allocation4 + $0x18] sm:$0xff] %vm389, 0.0
        %394 = vst.msk [vmem:[#allocation4 + $0x20] sm:$0xff] %vm389, 0.0
        %395 = vst.msk [vmem:[#allocation4 + $0x28] sm:$0xff] %vm389, 0.0
        %396 = vst.msk [vmem:[#allocation4 + $0x30] sm:$0xff] %vm389, 0.0
        %397 = vst.msk [vmem:[#allocation4 + $0x38] sm:$0xff] %vm389, 0.0
      $region36: #{attention_forward.4} parent=31 // pred_fallthru
        _
      %v398 = vld [vmem:[%s317] sm:$0xf]
      %v399 = vld [vmem:[%s317 + $0x4] sm:$0xf]
      %v400 = vld [vmem:[%s317 + $0x8] sm:$0xf]
      %v401 = vld [vmem:[%s317 + $0xc] sm:$0xf]
      %v402 = vld [vmem:[%s317 + $0x10] sm:$0xf]
      %v403 = vld [vmem:[%s317 + $0x14] sm:$0xf]
      %v404 = vld [vmem:[%s317 + $0x18] sm:$0xf]
      %v405 = vld [vmem:[%s317 + $0x1c] sm:$0xf]
      %v406 = vld [vmem:[%s334] sm:$0xf]
      %v407 = vld [vmem:[%s334 + $0x4] sm:$0xf]
      %v408 = vld [vmem:[%s334 + $0x8] sm:$0xf]
      %v409 = vld [vmem:[%s334 + $0xc] sm:$0xf]
      %v410 = vld [vmem:[%s334 + $0x10] sm:$0xf]
      %v411 = vld [vmem:[%s334 + $0x14] sm:$0xf]
      %v412 = vld [vmem:[%s334 + $0x18] sm:$0xf]
      %v413 = vld [vmem:[%s334 + $0x1c] sm:$0xf]
      %v416 = vunpack.c.l.b16 %v398
      %v417 = vunpack.c.l.b16 %v399
      %v418 = vpack.c.b16 %v417, %v416
      %v421 = vunpack.c.l.b16 %v406
      %v422 = vunpack.c.l.b16 %v407
      %v423 = vpack.c.b16 %v422, %v421
      %vm424 = vcmask 130048
      %v426 = vsel %vm424, %v418, 0
      %v429 = vsel %vm424, %v423, 0
      %431 = vmatpush.bf16.xpose.msra.mxu0 0
      %432 = vmatpush.bf16.xpose.msra.mxu0 0
      %433 = vmatpush.bf16.xpose.msra.mxu0 0
      %434 = vmatpush.bf16.xpose.msra.mxu0 0
      %435 = vmatpush.bf16.xpose.msra.mxu0 0
      %436 = vmatpush.bf16.xpose.msra.mxu0 0
      %437 = vmatpush.bf16.xpose.msra.mxu0 0
      %438 = vmatpush.bf16.xpose.msra.mxu0 %v429
      %439 = vmatmul.bf16.gmra.mxu0 %v426
      %v440 = vpop.f32.mrf.mxu0
      %v441 = vadd.f32 0.0, %v440
      %v442 = vpop.f32.mrf.mxu0
      %v443 = vadd.f32 0.0, %v442
      %444 = vdwg.mxu0
      %v447 = vunpack.c.l.b16 %v400
      %v448 = vunpack.c.l.b16 %v401
      %v449 = vpack.c.b16 %v448, %v447
      %v452 = vunpack.c.l.b16 %v408
      %v453 = vunpack.c.l.b16 %v409
      %v454 = vpack.c.b16 %v453, %v452
      %v456 = vsel %vm424, %v449, 0
      %v459 = vsel %vm424, %v454, 0
      %461 = vmatpush.bf16.xpose.msra.mxu0 0
      %462 = vmatpush.bf16.xpose.msra.mxu0 0
      %463 = vmatpush.bf16.xpose.msra.mxu0 0
      %464 = vmatpush.bf16.xpose.msra.mxu0 0
      %465 = vmatpush.bf16.xpose.msra.mxu0 0
      %466 = vmatpush.bf16.xpose.msra.mxu0 0
      %467 = vmatpush.bf16.xpose.msra.mxu0 0
      %468 = vmatpush.bf16.xpose.msra.mxu0 %v459
      %469 = vmatmul.bf16.gmra.mxu0 %v456
      %v470 = vpop.f32.mrf.mxu0
      %v471 = vadd.f32 0.0, %v470
      %v472 = vpop.f32.mrf.mxu0
      %v473 = vadd.f32 0.0, %v472
      %474 = vdwg.mxu0
      %v477 = vunpack.c.l.b16 %v402
      %v478 = vunpack.c.l.b16 %v403
      %v479 = vpack.c.b16 %v478, %v477
      %v482 = vunpack.c.l.b16 %v410
      %v483 = vunpack.c.l.b16 %v411
      %v484 = vpack.c.b16 %v483, %v482
      %v486 = vsel %vm424, %v479, 0
      %v489 = vsel %vm424, %v484, 0
      %491 = vmatpush.bf16.xpose.msra.mxu0 0
      %492 = vmatpush.bf16.xpose.msra.mxu0 0
      %493 = vmatpush.bf16.xpose.msra.mxu0 0
      %494 = vmatpush.bf16.xpose.msra.mxu0 0
      %495 = vmatpush.bf16.xpose.msra.mxu0 0
      %496 = vmatpush.bf16.xpose.msra.mxu0 0
      %497 = vmatpush.bf16.xpose.msra.mxu0 0
      %498 = vmatpush.bf16.xpose.msra.mxu0 %v489
      %499 = vmatmul.bf16.gmra.mxu0 %v486
      %v500 = vpop.f32.mrf.mxu0
      %v501 = vadd.f32 0.0, %v500
      %v502 = vpop.f32.mrf.mxu0
      %v503 = vadd.f32 0.0, %v502
      %504 = vdwg.mxu0
      %v507 = vunpack.c.l.b16 %v404
      %v508 = vunpack.c.l.b16 %v405
      %v509 = vpack.c.b16 %v508, %v507
      %v512 = vunpack.c.l.b16 %v412
      %v513 = vunpack.c.l.b16 %v413
      %v514 = vpack.c.b16 %v513, %v512
      %v516 = vsel %vm424, %v509, 0
      %v519 = vsel %vm424, %v514, 0
      %521 = vmatpush.bf16.xpose.msra.mxu0 0
      %522 = vmatpush.bf16.xpose.msra.mxu0 0
      %523 = vmatpush.bf16.xpose.msra.mxu0 0
      %524 = vmatpush.bf16.xpose.msra.mxu0 0
      %525 = vmatpush.bf16.xpose.msra.mxu0 0
      %526 = vmatpush.bf16.xpose.msra.mxu0 0
      %527 = vmatpush.bf16.xpose.msra.mxu0 0
      %528 = vmatpush.bf16.xpose.msra.mxu0 %v519
      %529 = vmatmul.bf16.gmra.mxu0 %v516
      %v530 = vpop.f32.mrf.mxu0
      %v531 = vadd.f32 0.0, %v530
      %v532 = vpop.f32.mrf.mxu0
      %v533 = vadd.f32 0.0, %v532
      %534 = vdwg.mxu0
      %s535 = smul.u32 %s23, 16
      %v536 = vlaneseq
      %v537 = vand.u32 %v536, 127
      %v538 = vstv %s535
      %v539 = vadd.s32 %v538, %v537
      %vm540 = vcmp.lt.s32.totalorder %v539, 12
      %v541 = vsel %vm540, %v441, -1e+30
      %v542 = vsel %vm540, %v443, -1e+30
      %v543 = vsel %vm540, %v471, -1e+30
      %v544 = vsel %vm540, %v473, -1e+30
      %v545 = vsel %vm540, %v501, -1e+30
      %v546 = vsel %vm540, %v503, -1e+30
      %v547 = vsel %vm540, %v531, -1e+30
      %v548 = vsel %vm540, %v533, -1e+30
      %v549 = vld [vmem:[#allocation2] sm:$0xff]
      %v550 = vld [vmem:[#allocation2 + $0x8] sm:$0xff]
      %v551 = vld [vmem:[#allocation2 + $0x10] sm:$0xff]
      %v552 = vld [vmem:[#allocation2 + $0x18] sm:$0xff]
      %v553 = vld [vmem:[#allocation2 + $0x20] sm:$0xff]
      %v554 = vld [vmem:[#allocation2 + $0x28] sm:$0xff]
      %v555 = vld [vmem:[#allocation2 + $0x30] sm:$0xff]
      %v556 = vld [vmem:[#allocation2 + $0x38] sm:$0xff]
      %v557 = vsel %vm424, %v541, -inf
      %558 = vmax.xlane.f32.xlu0 %v557
      %v559 = vpop.xlane.xlu0 %558
      %v560 = vsel %vm424, %v542, -inf
      %561 = vmax.xlane.f32.xlu0 %v560
      %v562 = vpop.xlane.xlu0 %561
      %v563 = vsel %vm424, %v543, -inf
      %564 = vmax.xlane.f32.xlu0 %v563
      %v565 = vpop.xlane.xlu0 %564
      %v566 = vsel %vm424, %v544, -inf
      %567 = vmax.xlane.f32.xlu0 %v566
      %v568 = vpop.xlane.xlu0 %567
      %v569 = vsel %vm424, %v545, -inf
      %570 = vmax.xlane.f32.xlu0 %v569
      %v571 = vpop.xlane.xlu0 %570
      %v572 = vsel %vm424, %v546, -inf
      %573 = vmax.xlane.f32.xlu0 %v572
      %v574 = vpop.xlane.xlu0 %573
      %v575 = vsel %vm424, %v547, -inf
      %576 = vmax.xlane.f32.xlu0 %v575
      %v577 = vpop.xlane.xlu0 %576
      %v578 = vsel %vm424, %v548, -inf
      %579 = vmax.xlane.f32.xlu0 %v578
      %v580 = vpop.xlane.xlu0 %579
      %v581 = vmax.f32 %v549, %v559
      %v582 = vmax.f32 %v550, %v562
      %v583 = vmax.f32 %v551, %v565
      %v584 = vmax.f32 %v552, %v568
      %v585 = vmax.f32 %v553, %v571
      %v586 = vmax.f32 %v554, %v574
      %v587 = vmax.f32 %v555, %v577
      %v588 = vmax.f32 %v556, %v580
      %v589 = vsub.f32 %v549, %v581
      %v590 = vsub.f32 %v550, %v582
      %v591 = vsub.f32 %v551, %v583
      %v592 = vsub.f32 %v552, %v584
      %v593 = vsub.f32 %v553, %v585
      %v594 = vsub.f32 %v554, %v586
      %v595 = vsub.f32 %v555, %v587
      %v596 = vsub.f32 %v556, %v588
      %v597 = vmul.f32 %v589, 1.442695
      %v598 = vpow.pop %v597
      %v599 = vmul.f32 %v590, 1.442695
      %v600 = vpow.pop %v599
      %v601 = vmul.f32 %v591, 1.442695
      %v602 = vpow.pop %v601
      %v603 = vmul.f32 %v592, 1.442695
      %v604 = vpow.pop %v603
      %v605 = vmul.f32 %v593, 1.442695
      %v606 = vpow.pop %v605
      %v607 = vmul.f32 %v594, 1.442695
      %v608 = vpow.pop %v607
      %v609 = vmul.f32 %v595, 1.442695
      %v610 = vpow.pop %v609
      %v611 = vmul.f32 %v596, 1.442695
      %v612 = vpow.pop %v611
      %614 = vset.pattern.permute.xlu0 0
      %615 = vperm.xlu0 %614, %v581
      %v616 = vpop.permute.xlu0 %615
      %619 = vset.pattern.permute.xlu0 0
      %620 = vperm.xlu0 %619, %v582
      %v621 = vpop.permute.xlu0 %620
      %624 = vset.pattern.permute.xlu0 0
      %625 = vperm.xlu0 %624, %v583
      %v626 = vpop.permute.xlu0 %625
      %629 = vset.pattern.permute.xlu0 0
      %630 = vperm.xlu0 %629, %v584
      %v631 = vpop.permute.xlu0 %630
      %634 = vset.pattern.permute.xlu0 0
      %635 = vperm.xlu0 %634, %v585
      %v636 = vpop.permute.xlu0 %635
      %639 = vset.pattern.permute.xlu0 0
      %640 = vperm.xlu0 %639, %v586
      %v641 = vpop.permute.xlu0 %640
      %644 = vset.pattern.permute.xlu0 0
      %645 = vperm.xlu0 %644, %v587
      %v646 = vpop.permute.xlu0 %645
      %649 = vset.pattern.permute.xlu0 0
      %650 = vperm.xlu0 %649, %v588
      %v651 = vpop.permute.xlu0 %650
      %v653 = vsub.f32 %v541, %v616
      %v654 = vsub.f32 %v542, %v621
      %v655 = vsub.f32 %v543, %v626
      %v656 = vsub.f32 %v544, %v631
      %v657 = vsub.f32 %v545, %v636
      %v658 = vsub.f32 %v546, %v641
      %v659 = vsub.f32 %v547, %v646
      %v660 = vsub.f32 %v548, %v651
      %v661 = vmul.f32 %v653, 1.442695
      %v662 = vpow.pop %v661
      %v663 = vmul.f32 %v654, 1.442695
      %v664 = vpow.pop %v663
      %v665 = vmul.f32 %v655, 1.442695
      %v666 = vpow.pop %v665
      %v667 = vmul.f32 %v656, 1.442695
      %v668 = vpow.pop %v667
      %v669 = vmul.f32 %v657, 1.442695
      %v670 = vpow.pop %v669
      %v671 = vmul.f32 %v658, 1.442695
      %v672 = vpow.pop %v671
      %v673 = vmul.f32 %v659, 1.442695
      %v674 = vpow.pop %v673
      %v675 = vmul.f32 %v660, 1.442695
      %v676 = vpow.pop %v675
      %v677 = vld [vmem:[#allocation3] sm:$0xff]
      %v678 = vld [vmem:[#allocation3 + $0x8] sm:$0xff]
      %v679 = vld [vmem:[#allocation3 + $0x10] sm:$0xff]
      %v680 = vld [vmem:[#allocation3 + $0x18] sm:$0xff]
      %v681 = vld [vmem:[#allocation3 + $0x20] sm:$0xff]
      %v682 = vld [vmem:[#allocation3 + $0x28] sm:$0xff]
      %v683 = vld [vmem:[#allocation3 + $0x30] sm:$0xff]
      %v684 = vld [vmem:[#allocation3 + $0x38] sm:$0xff]
      %v685 = vmul.f32 %v598, %v677
      %v686 = vmul.f32 %v600, %v678
      %v687 = vmul.f32 %v602, %v679
      %v688 = vmul.f32 %v604, %v680
      %v689 = vmul.f32 %v606, %v681
      %v690 = vmul.f32 %v608, %v682
      %v691 = vmul.f32 %v610, %v683
      %v692 = vmul.f32 %v612, %v684
      %v693 = vsel %vm424, %v662, 0.0
      %694 = vadd.xlane.f32.xlu0 %v693
      %v695 = vpop.xlane.xlu0 %694
      %v696 = vsel %vm424, %v664, 0.0
      %697 = vadd.xlane.f32.xlu0 %v696
      %v698 = vpop.xlane.xlu0 %697
      %v699 = vsel %vm424, %v666, 0.0
      %700 = vadd.xlane.f32.xlu0 %v699
      %v701 = vpop.xlane.xlu0 %700
      %v702 = vsel %vm424, %v668, 0.0
      %703 = vadd.xlane.f32.xlu0 %v702
      %v704 = vpop.xlane.xlu0 %703
      %v705 = vsel %vm424, %v670, 0.0
      %706 = vadd.xlane.f32.xlu0 %v705
      %v707 = vpop.xlane.xlu0 %706
      %v708 = vsel %vm424, %v672, 0.0
      %709 = vadd.xlane.f32.xlu0 %v708
      %v710 = vpop.xlane.xlu0 %709
      %v711 = vsel %vm424, %v674, 0.0
      %712 = vadd.xlane.f32.xlu0 %v711
      %v713 = vpop.xlane.xlu0 %712
      %v714 = vsel %vm424, %v676, 0.0
      %715 = vadd.xlane.f32.xlu0 %v714
      %v716 = vpop.xlane.xlu0 %715
      %v717 = vadd.f32 %v685, %v695
      %v718 = vadd.f32 %v686, %v698
      %v719 = vadd.f32 %v687, %v701
      %v720 = vadd.f32 %v688, %v704
      %v721 = vadd.f32 %v689, %v707
      %v722 = vadd.f32 %v690, %v710
      %v723 = vadd.f32 %v691, %v713
      %v724 = vadd.f32 %v692, %v716
      %vm725 = vcmask 7168
      %726 = vst.msk [vmem:[#allocation3] sm:$0xff] %vm725, %v717
      %727 = vst.msk [vmem:[#allocation3 + $0x8] sm:$0xff] %vm725, %v718
      %728 = vst.msk [vmem:[#allocation3 + $0x10] sm:$0xff] %vm725, %v719
      %729 = vst.msk [vmem:[#allocation3 + $0x18] sm:$0xff] %vm725, %v720
      %730 = vst.msk [vmem:[#allocation3 + $0x20] sm:$0xff] %vm725, %v721
      %731 = vst.msk [vmem:[#allocation3 + $0x28] sm:$0xff] %vm725, %v722
      %732 = vst.msk [vmem:[#allocation3 + $0x30] sm:$0xff] %vm725, %v723
      %733 = vst.msk [vmem:[#allocation3 + $0x38] sm:$0xff] %vm725, %v724
      %v734 = vpack.c.bf16 %v662, %v662
      %v735 = vpack.c.bf16 %v664, %v664
      %v736 = vpack.c.bf16 %v666, %v666
      %v737 = vpack.c.bf16 %v668, %v668
      %v738 = vpack.c.bf16 %v670, %v670
      %v739 = vpack.c.bf16 %v672, %v672
      %v740 = vpack.c.bf16 %v674, %v674
      %v741 = vpack.c.bf16 %v676, %v676
      %v742 = vld [vmem:[%s351] sm:$0xf]
      %v743 = vld [vmem:[%s351 + $0x4] sm:$0xf]
      %v744 = vld [vmem:[%s351 + $0x8] sm:$0xf]
      %v745 = vld [vmem:[%s351 + $0xc] sm:$0xf]
      %v746 = vld [vmem:[%s351 + $0x10] sm:$0xf]
      %v747 = vld [vmem:[%s351 + $0x14] sm:$0xf]
      %v748 = vld [vmem:[%s351 + $0x18] sm:$0xf]
      %v749 = vld [vmem:[%s351 + $0x1c] sm:$0xf]
      %v752 = vunpack.c.l.b16 %v734
      %v753 = vunpack.c.l.b16 %v735
      %v754 = vpack.c.b16 %v753, %v752
      %v757 = vunpack.c.l.b16 %v742
      %v758 = vunpack.c.l.b16 %v743
      %v759 = vpack.c.b16 %v758, %v757
      %v762 = vsel %vm424, %v754, 0
      %764 = vmatpush.bf16.msra.mxu0 0
      %765 = vmatpush.bf16.msra.mxu0 0
      %766 = vmatpush.bf16.msra.mxu0 0
      %767 = vmatpush.bf16.msra.mxu0 0
      %768 = vmatpush.bf16.msra.mxu0 0
      %769 = vmatpush.bf16.msra.mxu0 0
      %770 = vmatpush.bf16.msra.mxu0 0
      %771 = vmatpush.bf16.msra.mxu0 %v759
      %772 = vmatmul.bf16.gmra.mxu0 %v762
      %v773 = vpop.f32.mrf.mxu0
      %v774 = vadd.f32 0.0, %v773
      %v775 = vpop.f32.mrf.mxu0
      %v776 = vadd.f32 0.0, %v775
      %777 = vdwg.mxu0
      %v780 = vunpack.c.l.b16 %v736
      %v781 = vunpack.c.l.b16 %v737
      %v782 = vpack.c.b16 %v781, %v780
      %v785 = vunpack.c.l.b16 %v744
      %v786 = vunpack.c.l.b16 %v745
      %v787 = vpack.c.b16 %v786, %v785
      %v790 = vsel %vm424, %v782, 0
      %792 = vmatpush.bf16.msra.mxu0 0
      %793 = vmatpush.bf16.msra.mxu0 0
      %794 = vmatpush.bf16.msra.mxu0 0
      %795 = vmatpush.bf16.msra.mxu0 0
      %796 = vmatpush.bf16.msra.mxu0 0
      %797 = vmatpush.bf16.msra.mxu0 0
      %798 = vmatpush.bf16.msra.mxu0 0
      %799 = vmatpush.bf16.msra.mxu0 %v787
      %800 = vmatmul.bf16.gmra.mxu0 %v790
      %v801 = vpop.f32.mrf.mxu0
      %v802 = vadd.f32 0.0, %v801
      %v803 = vpop.f32.mrf.mxu0
      %v804 = vadd.f32 0.0, %v803
      %805 = vdwg.mxu0
      %v808 = vunpack.c.l.b16 %v738
      %v809 = vunpack.c.l.b16 %v739
      %v810 = vpack.c.b16 %v809, %v808
      %v813 = vunpack.c.l.b16 %v746
      %v814 = vunpack.c.l.b16 %v747
      %v815 = vpack.c.b16 %v814, %v813
      %v818 = vsel %vm424, %v810, 0
      %820 = vmatpush.bf16.msra.mxu0 0
      %821 = vmatpush.bf16.msra.mxu0 0
      %822 = vmatpush.bf16.msra.mxu0 0
      %823 = vmatpush.bf16.msra.mxu0 0
      %824 = vmatpush.bf16.msra.mxu0 0
      %825 = vmatpush.bf16.msra.mxu0 0
      %826 = vmatpush.bf16.msra.mxu0 0
      %827 = vmatpush.bf16.msra.mxu0 %v815
      %828 = vmatmul.bf16.gmra.mxu0 %v818
      %v829 = vpop.f32.mrf.mxu0
      %v830 = vadd.f32 0.0, %v829
      %v831 = vpop.f32.mrf.mxu0
      %v832 = vadd.f32 0.0, %v831
      %833 = vdwg.mxu0
      %v836 = vunpack.c.l.b16 %v740
      %v837 = vunpack.c.l.b16 %v741
      %v838 = vpack.c.b16 %v837, %v836
      %v841 = vunpack.c.l.b16 %v748
      %v842 = vunpack.c.l.b16 %v749
      %v843 = vpack.c.b16 %v842, %v841
      %v846 = vsel %vm424, %v838, 0
      %848 = vmatpush.bf16.msra.mxu0 0
      %849 = vmatpush.bf16.msra.mxu0 0
      %850 = vmatpush.bf16.msra.mxu0 0
      %851 = vmatpush.bf16.msra.mxu0 0
      %852 = vmatpush.bf16.msra.mxu0 0
      %853 = vmatpush.bf16.msra.mxu0 0
      %854 = vmatpush.bf16.msra.mxu0 0
      %855 = vmatpush.bf16.msra.mxu0 %v843
      %856 = vmatmul.bf16.gmra.mxu0 %v846
      %v857 = vpop.f32.mrf.mxu0
      %v858 = vadd.f32 0.0, %v857
      %v859 = vpop.f32.mrf.mxu0
      %v860 = vadd.f32 0.0, %v859
      %861 = vdwg.mxu0
      %v862 = vld [vmem:[#allocation4] sm:$0xff]
      %v863 = vld [vmem:[#allocation4 + $0x8] sm:$0xff]
      %v864 = vld [vmem:[#allocation4 + $0x10] sm:$0xff]
      %v865 = vld [vmem:[#allocation4 + $0x18] sm:$0xff]
      %v866 = vld [vmem:[#allocation4 + $0x20] sm:$0xff]
      %v867 = vld [vmem:[#allocation4 + $0x28] sm:$0xff]
      %v868 = vld [vmem:[#allocation4 + $0x30] sm:$0xff]
      %v869 = vld [vmem:[#allocation4 + $0x38] sm:$0xff]
      %871 = vset.pattern.permute.xlu0 0
      %872 = vperm.xlu0 %871, %v598
      %v873 = vpop.permute.xlu0 %872
      %876 = vset.pattern.permute.xlu0 0
      %877 = vperm.xlu0 %876, %v600
      %v878 = vpop.permute.xlu0 %877
      %881 = vset.pattern.permute.xlu0 0
      %882 = vperm.xlu0 %881, %v602
      %v883 = vpop.permute.xlu0 %882
      %886 = vset.pattern.permute.xlu0 0
      %887 = vperm.xlu0 %886, %v604
      %v888 = vpop.permute.xlu0 %887
      %891 = vset.pattern.permute.xlu0 0
      %892 = vperm.xlu0 %891, %v606
      %v893 = vpop.permute.xlu0 %892
      %896 = vset.pattern.permute.xlu0 0
      %897 = vperm.xlu0 %896, %v608
      %v898 = vpop.permute.xlu0 %897
      %901 = vset.pattern.permute.xlu0 0
      %902 = vperm.xlu0 %901, %v610
      %v903 = vpop.permute.xlu0 %902
      %906 = vset.pattern.permute.xlu0 0
      %907 = vperm.xlu0 %906, %v612
      %v908 = vpop.permute.xlu0 %907
      %v910 = vmul.f32 %v873, %v862
      %v911 = vmul.f32 %v878, %v863
      %v912 = vmul.f32 %v883, %v864
      %v913 = vmul.f32 %v888, %v865
      %v914 = vmul.f32 %v893, %v866
      %v915 = vmul.f32 %v898, %v867
      %v916 = vmul.f32 %v903, %v868
      %v917 = vmul.f32 %v908, %v869
      %v918 = vadd.f32 %v910, %v774
      %v919 = vadd.f32 %v911, %v776
      %v920 = vadd.f32 %v912, %v802
      %v921 = vadd.f32 %v913, %v804
      %v922 = vadd.f32 %v914, %v830
      %v923 = vadd.f32 %v915, %v832
      %v924 = vadd.f32 %v916, %v858
      %v925 = vadd.f32 %v917, %v860
      %926 = vst.msk [vmem:[#allocation4] sm:$0xff] %vm424, %v918
      %927 = vst.msk [vmem:[#allocation4 + $0x8] sm:$0xff] %vm424, %v919
      %928 = vst.msk [vmem:[#allocation4 + $0x10] sm:$0xff] %vm424, %v920
      %929 = vst.msk [vmem:[#allocation4 + $0x18] sm:$0xff] %vm424, %v921
      %930 = vst.msk [vmem:[#allocation4 + $0x20] sm:$0xff] %vm424, %v922
      %931 = vst.msk [vmem:[#allocation4 + $0x28] sm:$0xff] %vm424, %v923
      %932 = vst.msk [vmem:[#allocation4 + $0x30] sm:$0xff] %vm424, %v924
      %933 = vst.msk [vmem:[#allocation4 + $0x38] sm:$0xff] %vm424, %v925
      %934 = vst.msk [vmem:[#allocation2] sm:$0xff] %vm725, %v581
      %935 = vst.msk [vmem:[#allocation2 + $0x8] sm:$0xff] %vm725, %v582
      %936 = vst.msk [vmem:[#allocation2 + $0x10] sm:$0xff] %vm725, %v583
      %937 = vst.msk [vmem:[#allocation2 + $0x18] sm:$0xff] %vm725, %v584
      %938 = vst.msk [vmem:[#allocation2 + $0x20] sm:$0xff] %vm725, %v585
      %939 = vst.msk [vmem:[#allocation2 + $0x28] sm:$0xff] %vm725, %v586
      %940 = vst.msk [vmem:[#allocation2 + $0x30] sm:$0xff] %vm725, %v587
      %941 = vst.msk [vmem:[#allocation2 + $0x38] sm:$0xff] %vm725, %v588
      // Predicated region
      $region37: #{attention_forward.4} parent=31 // pred_check
        %p942 = pneg %p368
      $region38: #{attention_forward.4} parent=31 // pred_check_branch
        %944 = sbr.rel (%p942) target = $region40
      $region39: #{attention_forward.4} parent=31 // pred_region
        %v945 = vld [vmem:[#allocation4] sm:$0xff]
        %v946 = vld [vmem:[#allocation4 + $0x8] sm:$0xff]
        %v947 = vld [vmem:[#allocation4 + $0x10] sm:$0xff]
        %v948 = vld [vmem:[#allocation4 + $0x18] sm:$0xff]
        %v949 = vld [vmem:[#allocation4 + $0x20] sm:$0xff]
        %v950 = vld [vmem:[#allocation4 + $0x28] sm:$0xff]
        %v951 = vld [vmem:[#allocation4 + $0x30] sm:$0xff]
        %v952 = vld [vmem:[#allocation4 + $0x38] sm:$0xff]
        %v953 = vld [vmem:[#allocation3] sm:$0xff]
        %v954 = vld [vmem:[#allocation3 + $0x8] sm:$0xff]
        %v955 = vld [vmem:[#allocation3 + $0x10] sm:$0xff]
        %v956 = vld [vmem:[#allocation3 + $0x18] sm:$0xff]
        %v957 = vld [vmem:[#allocation3 + $0x20] sm:$0xff]
        %v958 = vld [vmem:[#allocation3 + $0x28] sm:$0xff]
        %v959 = vld [vmem:[#allocation3 + $0x30] sm:$0xff]
        %v960 = vld [vmem:[#allocation3 + $0x38] sm:$0xff]
        %962 = vset.pattern.permute.xlu0 0
        %963 = vperm.xlu0 %962, %v953
        %v964 = vpop.permute.xlu0 %963
        %967 = vset.pattern.permute.xlu0 0
        %968 = vperm.xlu0 %967, %v954
        %v969 = vpop.permute.xlu0 %968
        %972 = vset.pattern.permute.xlu0 0
        %973 = vperm.xlu0 %972, %v955
        %v974 = vpop.permute.xlu0 %973
        %977 = vset.pattern.permute.xlu0 0
        %978 = vperm.xlu0 %977, %v956
        %v979 = vpop.permute.xlu0 %978
        %982 = vset.pattern.permute.xlu0 0
        %983 = vperm.xlu0 %982, %v957
        %v984 = vpop.permute.xlu0 %983
        %987 = vset.pattern.permute.xlu0 0
        %988 = vperm.xlu0 %987, %v958
        %v989 = vpop.permute.xlu0 %988
        %992 = vset.pattern.permute.xlu0 0
        %993 = vperm.xlu0 %992, %v959
        %v994 = vpop.permute.xlu0 %993
        %997 = vset.pattern.permute.xlu0 0
        %998 = vperm.xlu0 %997, %v960
        %v999 = vpop.permute.xlu0 %998
        %v1001 = vrcp.pop %v964
        %v1002 = vmul.f32 %v964, %v1001
        %v1003 = vsub.f32 1.0, %v1002
        %v1004 = vmul.f32 %v1001, %v1003
        %v1005 = vadd.f32 %v1001, %v1004
        %vm1006 = vweird.f32 %v964
        %vm1007 = vweird.f32 %v1001
        %vm1008 = vmor %vm1006, %vm1007
        %v1009 = vsel %vm1008, %v1001, %v1005
        %v1010 = vand.u32 2147483647, %v964
        %vm1011 = vcmp.eq.f32.partialorder %v1010, 8.507059e+37
        %v1012 = vand.u32 %v964, 2147483648
        %v1013 = vor.u32 1.1754944e-38, %v1012
        %v1014 = vsel %vm1011, %v1013, %v1009
        %v1015 = vmul.f32 %v945, %v1014
        %v1016 = vrcp.pop %v969
        %v1017 = vmul.f32 %v969, %v1016
        %v1018 = vsub.f32 1.0, %v1017
        %v1019 = vmul.f32 %v1016, %v1018
        %v1020 = vadd.f32 %v1016, %v1019
        %vm1021 = vweird.f32 %v969
        %vm1022 = vweird.f32 %v1016
        %vm1023 = vmor %vm1021, %vm1022
        %v1024 = vsel %vm1023, %v1016, %v1020
        %v1025 = vand.u32 2147483647, %v969
        %vm1026 = vcmp.eq.f32.partialorder %v1025, 8.507059e+37
        %v1027 = vand.u32 %v969, 2147483648
        %v1028 = vor.u32 1.1754944e-38, %v1027
        %v1029 = vsel %vm1026, %v1028, %v1024
        %v1030 = vmul.f32 %v946, %v1029
        %v1031 = vrcp.pop %v974
        %v1032 = vmul.f32 %v974, %v1031
        %v1033 = vsub.f32 1.0, %v1032
        %v1034 = vmul.f32 %v1031, %v1033
        %v1035 = vadd.f32 %v1031, %v1034
        %vm1036 = vweird.f32 %v974
        %vm1037 = vweird.f32 %v1031
        %vm1038 = vmor %vm1036, %vm1037
        %v1039 = vsel %vm1038, %v1031, %v1035
        %v1040 = vand.u32 2147483647, %v974
        %vm1041 = vcmp.eq.f32.partialorder %v1040, 8.507059e+37
        %v1042 = vand.u32 %v974, 2147483648
        %v1043 = vor.u32 1.1754944e-38, %v1042
        %v1044 = vsel %vm1041, %v1043, %v1039
        %v1045 = vmul.f32 %v947, %v1044
        %v1046 = vrcp.pop %v979
        %v1047 = vmul.f32 %v979, %v1046
        %v1048 = vsub.f32 1.0, %v1047
        %v1049 = vmul.f32 %v1046, %v1048
        %v1050 = vadd.f32 %v1046, %v1049
        %vm1051 = vweird.f32 %v979
        %vm1052 = vweird.f32 %v1046
        %vm1053 = vmor %vm1051, %vm1052
        %v1054 = vsel %vm1053, %v1046, %v1050
        %v1055 = vand.u32 2147483647, %v979
        %vm1056 = vcmp.eq.f32.partialorder %v1055, 8.507059e+37
        %v1057 = vand.u32 %v979, 2147483648
        %v1058 = vor.u32 1.1754944e-38, %v1057
        %v1059 = vsel %vm1056, %v1058, %v1054
        %v1060 = vmul.f32 %v948, %v1059
        %v1061 = vrcp.pop %v984
        %v1062 = vmul.f32 %v984, %v1061
        %v1063 = vsub.f32 1.0, %v1062
        %v1064 = vmul.f32 %v1061, %v1063
        %v1065 = vadd.f32 %v1061, %v1064
        %vm1066 = vweird.f32 %v984
        %vm1067 = vweird.f32 %v1061
        %vm1068 = vmor %vm1066, %vm1067
        %v1069 = vsel %vm1068, %v1061, %v1065
        %v1070 = vand.u32 2147483647, %v984
        %vm1071 = vcmp.eq.f32.partialorder %v1070, 8.507059e+37
        %v1072 = vand.u32 %v984, 2147483648
        %v1073 = vor.u32 1.1754944e-38, %v1072
        %v1074 = vsel %vm1071, %v1073, %v1069
        %v1075 = vmul.f32 %v949, %v1074
        %v1076 = vrcp.pop %v989
        %v1077 = vmul.f32 %v989, %v1076
        %v1078 = vsub.f32 1.0, %v1077
        %v1079 = vmul.f32 %v1076, %v1078
        %v1080 = vadd.f32 %v1076, %v1079
        %vm1081 = vweird.f32 %v989
        %vm1082 = vweird.f32 %v1076
        %vm1083 = vmor %vm1081, %vm1082
        %v1084 = vsel %vm1083, %v1076, %v1080
        %v1085 = vand.u32 2147483647, %v989
        %vm1086 = vcmp.eq.f32.partialorder %v1085, 8.507059e+37
        %v1087 = vand.u32 %v989, 2147483648
        %v1088 = vor.u32 1.1754944e-38, %v1087
        %v1089 = vsel %vm1086, %v1088, %v1084
        %v1090 = vmul.f32 %v950, %v1089
        %v1091 = vrcp.pop %v994
        %v1092 = vmul.f32 %v994, %v1091
        %v1093 = vsub.f32 1.0, %v1092
        %v1094 = vmul.f32 %v1091, %v1093
        %v1095 = vadd.f32 %v1091, %v1094
        %vm1096 = vweird.f32 %v994
        %vm1097 = vweird.f32 %v1091
        %vm1098 = vmor %vm1096, %vm1097
        %v1099 = vsel %vm1098, %v1091, %v1095
        %v1100 = vand.u32 2147483647, %v994
        %vm1101 = vcmp.eq.f32.partialorder %v1100, 8.507059e+37
        %v1102 = vand.u32 %v994, 2147483648
        %v1103 = vor.u32 1.1754944e-38, %v1102
        %v1104 = vsel %vm1101, %v1103, %v1099
        %v1105 = vmul.f32 %v951, %v1104
        %v1106 = vrcp.pop %v999
        %v1107 = vmul.f32 %v999, %v1106
        %v1108 = vsub.f32 1.0, %v1107
        %v1109 = vmul.f32 %v1106, %v1108
        %v1110 = vadd.f32 %v1106, %v1109
        %vm1111 = vweird.f32 %v999
        %vm1112 = vweird.f32 %v1106
        %vm1113 = vmor %vm1111, %vm1112
        %v1114 = vsel %vm1113, %v1106, %v1110
        %v1115 = vand.u32 2147483647, %v999
        %vm1116 = vcmp.eq.f32.partialorder %v1115, 8.507059e+37
        %v1117 = vand.u32 %v999, 2147483648
        %v1118 = vor.u32 1.1754944e-38, %v1117
        %v1119 = vsel %vm1116, %v1118, %v1114
        %v1120 = vmul.f32 %v952, %v1119
        %v1121 = vpack.c.bf16 %v1015, %v1015
        %v1122 = vpack.c.bf16 %v1030, %v1030
        %vm1123 = vcmask 125952
        %1124 = vst.msk [vmem:[%s365] sm:$0xf] %vm1123, %v1121
        %1125 = vst.msk [vmem:[%s365 + $0x4] sm:$0xf] %vm1123, %v1122
        %v1126 = vpack.c.bf16 %v1045, %v1045
        %v1127 = vpack.c.bf16 %v1060, %v1060
        %1130 = vrot.lane.b32.xlu0 %v1126, 16
        %v1131 = vpop.permute.xlu0 %1130
        %1132 = vrot.lane.b32.xlu0 %v1127, 16
        %v1133 = vpop.permute.xlu0 %1132
        %vm1136 = vcmask 257152
        %1137 = vst.msk [vmem:[%s365] sm:$0xf] %vm1136, %v1131
        %1138 = vst.msk [vmem:[%s365 + $0x4] sm:$0xf] %vm1136, %v1133
        %v1139 = vpack.c.bf16 %v1075, %v1075
        %v1140 = vpack.c.bf16 %v1090, %v1090
        %1143 = vrot.lane.b32.xlu0 %v1139, 32
        %v1144 = vpop.permute.xlu0 %1143
        %1145 = vrot.lane.b32.xlu0 %v1140, 32
        %v1146 = vpop.permute.xlu0 %1145
        %vm1149 = vcmask 388352
        %1150 = vst.msk [vmem:[%s365] sm:$0xf] %vm1149, %v1144
        %1151 = vst.msk [vmem:[%s365 + $0x4] sm:$0xf] %vm1149, %v1146
        %v1152 = vpack.c.bf16 %v1105, %v1105
        %v1153 = vpack.c.bf16 %v1120, %v1120
        %1156 = vrot.lane.b32.xlu0 %v1152, 48
        %v1157 = vpop.permute.xlu0 %1156
        %1158 = vrot.lane.b32.xlu0 %v1153, 48
        %v1159 = vpop.permute.xlu0 %1158
        %vm1162 = vcmask 519552
        %1163 = vst.msk [vmem:[%s365] sm:$0xf] %vm1162, %v1157
        %1164 = vst.msk [vmem:[%s365 + $0x4] sm:$0xf] %vm1162, %v1159
      $region40: #{attention_forward.4} parent=31 // pred_fallthru
        _
      %s1165 = smul.u32 2, %s22
      %p1166 = scmp.lt.s32.totalorder %s20, 1
      %s1167 = scalar_select %p1166, %s20, 1
      %p1168 = scmp.lt.s32.totalorder %s1165, 1
      %s1169 = scalar_select %p1168, %s1165, 1
      %p1170 = scmp.lt.s32.totalorder %s21, 0
      %s1171 = scalar_select %p1170, %s21, 0
      %s1172 = sadd.s32 %s1171, %s1169
      %s1173 = smul.addr %s1167, 2
      %s1174 = sadd.s32 %s1172, %s1173
      %s1175 = smul.addr %s1174, 4
      %s1176 = scalar_lea.vmem %s3, %s1175
      // Predicated region
      $region41: #{attention_forward.4} parent=31 // pred_check
        %p1177 = pneg %p152
      $region42: #{attention_forward.4} parent=31 // pred_check_branch
        %1179 = sbr.rel (%p1177) target = $region44
      $region43: #{attention_forward.4} parent=31 // pred_region
        %s1180 = smul.u32 2, %s22
      $region44: #{attention_forward.4} parent=31 // pred_fallthru
        _
    $region32: #{attention_forward.4} parent=5 // pred_fallthru
      _
    %p1181 = scmp.le.s32.totalorder 2, %s9
    // Predicated region
    $region45: #{attention_forward.4} parent=5 // pred_check
      %p1182 = pneg %p1181
    $region46: #{attention_forward.4} parent=5 // pred_check_branch
      %1184 = sbr.rel (%p1182) target = $region48
    $region47: #{attention_forward.4} parent=5 // pred_region
      %s1185 = ssub.s32 %s9, 2
      // Predicated region
      $region49: #{attention_forward.4} parent=47 // pred_check
        %p1186 = pneg %p158
      $region50: #{attention_forward.4} parent=47 // pred_check_branch
        %1188 = sbr.rel (%p1186) target = $region52
      $region51: #{attention_forward.4} parent=47 // pred_region
        %s1189 = smul.u32 2, %s26
        %p1190 = scmp.lt.s32.totalorder %s24, 1
        %s1191 = scalar_select %p1190, %s24, 1
        %p1192 = scmp.lt.s32.totalorder %s1189, 1
        %s1193 = scalar_select %p1192, %s1189, 1
        %p1194 = scmp.lt.s32.totalorder %s25, 0
        %s1195 = scalar_select %p1194, %s25, 0
        %s1196 = sadd.s32 %s1195, %s1193
        %s1197 = smul.addr %s1191, 2
        %s1198 = sadd.s32 %s1196, %s1197
        %s1199 = smul.addr %s1198, 4
        %s1200 = scalar_lea.vmem %s3, %s1199
      $region52: #{attention_forward.4} parent=47 // pred_fallthru
        _
    $region48: #{attention_forward.4} parent=5 // pred_fallthru
      _
  $region6: #{attention_forward.4} parent=0 // loop_footer
    %s13 = sadd.s32 1, %s9
  $region7: #{attention_forward.4} parent=0 // loop_footer_branch
    %8 = sbr.rel target = $region3
  $region8: #{attention_forward.4} parent=0 // loop_exit
    _

</llo_original>
